<compile_context>
chip_gen: v6e
topology: v6e:2x2x1
jax: 0.10.0
libtpu: 0.0.40
codegen_flags: <defaults>
</compile_context>

<pallas_src>
import functools

import jax
import jax.numpy as jnp
from jax.experimental import pallas as pl
from jax.experimental.pallas import tpu as pltpu


LANE = 128  # node dim and embedding dim are padded to multiples of this


def _round_up(x, m):
    return ((x + m - 1) // m) * m


# ----------------------------------------------------------------------------
# Fused Pallas kernel: all GNN layers + layer-mean in one call
# ----------------------------------------------------------------------------
def _hgnn_fused_kernel(adj_ref, x_ref, out_ref, x_vmem, *, n_layers):
    """adj_ref : [Np, Np] bf16  combined block adjacency, pre-scaled by 0.5
       x_ref   : [Np, Dp] bf16  concatenated (user; item) ego embeddings
       out_ref : [Np, Dp] f32   layer-mean accumulator / final output
       x_vmem  : [Np, Dp] bf16  scratch holding the current layer embeddings
    """
    x_vmem[...] = x_ref[...]
    out_ref[...] = x_ref[...].astype(jnp.float32)          # acc = ego embeddings
    for _ in range(n_layers):                               # small static unroll
        new = jnp.dot(adj_ref[...], x_vmem[...],
                      preferred_element_type=jnp.float32)   # one MXU op / layer
        out_ref[...] += new                                  # f32 running sum
        x_vmem[...] = new.astype(x_vmem.dtype)               # next-layer operand
    out_ref[...] = out_ref[...] * jnp.float32(1.0 / (n_layers + 1))


def hgnn_forward_fused(user_graph, user_item_graph, item_graph,
                       user_emb, item_emb, *, n_layers,
                       compute_dtype=jnp.bfloat16):
    """Full HeterogeneousGNN forward in one pallas_call.

    Returns (user_final [U, D], item_final [I, D]) in float32.
    """
    U, D = user_emb.shape
    I = item_emb.shape[0]
    N = U + I
    Np = _round_up(N, LANE)
    Dp = _round_up(D, LANE)

    # Combined block adjacency, pre-scaled by 0.5 (the 2-way message mean),
    # zero-padded to [Np, Np].  The transpose of user_item_graph happens once
    # here (not per layer).  In a training loop this block matrix is step-
    # invariant and can be precomputed outside the forward.
    half = jnp.asarray(0.5, user_graph.dtype)
    top = jnp.concatenate([user_graph, user_item_graph], axis=1)
    bot = jnp.concatenate([user_item_graph.T, item_graph], axis=1)
    adj = jnp.concatenate([top, bot], axis=0) * half
    adj_p = jnp.pad(adj, ((0, Np - N), (0, Np - N))).astype(compute_dtype)

    # Concatenated ego embeddings, lane-dense [Np, Dp].
    x = jnp.concatenate([user_emb, item_emb], axis=0)
    x_p = jnp.pad(x, ((0, Np - N), (0, Dp - D))).astype(compute_dtype)

    kernel = functools.partial(_hgnn_fused_kernel, n_layers=n_layers)
    vmem = pl.BlockSpec(memory_space=pltpu.MemorySpace.VMEM)

    out_p = pl.pallas_call(
        kernel,
        out_shape=jax.ShapeDtypeStruct((Np, Dp), jnp.float32),
        in_specs=[vmem, vmem],
        out_specs=vmem,
        scratch_shapes=[pltpu.VMEM((Np, Dp), compute_dtype)],
    )(adj_p, x_p)

    # NOTE: if downstream consumers are matmuls, prefer returning the padded
    # lane-dense [Np, Dp] slab and slicing lazily where a narrow view is needed.
    return out_p[:U, :D], out_p[U:N, :D]


# ----------------------------------------------------------------------------
# Parameter init (matches nn.init.xavier_uniform_)
# ----------------------------------------------------------------------------
def xavier_uniform(key, shape, dtype=jnp.float32):
    fan_in, fan_out = shape[0], shape[1]
    bound = jnp.sqrt(6.0 / (fan_in + fan_out))
    return jax.random.uniform(key, shape, dtype=dtype, minval=-bound, maxval=bound)


def init_params(key, user_num, item_num, embed_dim):
    k_u, k_i = jax.random.split(key)
    return {
        "user_embedding": xavier_uniform(k_u, (user_num, embed_dim)),
        "item_embedding": xavier_uniform(k_i, (item_num, embed_dim)),
    }


# ----------------------------------------------------------------------------
# Forward pass (mirrors HeterogeneousGNN.forward)
# ----------------------------------------------------------------------------
def heterogeneous_gnn_forward(params, user_graph, user_item_graph, item_graph,
                              *, user_num, item_num, n_layers=2):
    return hgnn_forward_fused(
        user_graph, user_item_graph, item_graph,
        params["user_embedding"], params["item_embedding"],
        n_layers=n_layers)


# ----------------------------------------------------------------------------
# Pure-JAX reference for correctness checking
# ----------------------------------------------------------------------------
def reference_forward(params, user_graph, user_item_graph, item_graph,
                      *, user_num, item_num, n_layers=2):
    user_emb = params["user_embedding"]
    item_emb = params["item_embedding"]
    ego = jnp.concatenate([user_emb, item_emb], axis=0)
    all_embeddings = [ego]
    for _ in range(n_layers):
        ui_u = user_item_graph @ item_emb
        ui_i = user_item_graph.T @ user_emb
        uu = user_graph @ user_emb
        ii = item_graph @ item_emb
        user_emb = (uu + ui_u) / 2.0
        item_emb = (ii + ui_i) / 2.0
        all_embeddings.append(jnp.concatenate([user_emb, item_emb], axis=0))
    final = jnp.mean(jnp.stack(all_embeddings, axis=1), axis=1)
    return final[:user_num], final[user_num:]


if __name__ == "__main__":
    USER_NUM = 64
    ITEM_NUM = 96
    EMBED_DIM = 32
    N_LAYERS = 2

    key = jax.random.PRNGKey(0)
    k_param, k_ug, k_uig, k_ig = jax.random.split(key, 4)

    params = init_params(k_param, USER_NUM, ITEM_NUM, EMBED_DIM)

    # Dense stand-ins for the (normalized) sparse adjacency matrices.
    # TODO(synk): torch.sparse.mm has no sparse Pallas equivalent here; the
    # adjacency is treated as dense (fine for these shapes).
    def rand_adj(k, shape, density=0.1):
        vals = jax.random.uniform(k, shape, dtype=jnp.float32)
        mask = (vals < density).astype(jnp.float32)
        adj = mask * vals
        row_sum = jnp.maximum(adj.sum(axis=1, keepdims=True), 1e-6)
        return adj / row_sum

    user_graph = rand_adj(k_ug, (USER_NUM, USER_NUM))
    user_item_graph = rand_adj(k_uig, (USER_NUM, ITEM_NUM))
    item_graph = rand_adj(k_ig, (ITEM_NUM, ITEM_NUM))

    fwd = jax.jit(functools.partial(
        heterogeneous_gnn_forward,
        user_num=USER_NUM, item_num=ITEM_NUM, n_layers=N_LAYERS))

    user_out, item_out = fwd(params, user_graph, user_item_graph, item_graph)
    jax.block_until_ready((user_out, item_out))

    # Correctness check vs pure-JAX f32 reference.  Tolerance is loosened to
    # account for the bf16 MXU operands (f32 accumulation) inside the kernel.
    ref_user, ref_item = reference_forward(
        params, user_graph, user_item_graph, item_graph,
        user_num=USER_NUM, item_num=ITEM_NUM, n_layers=N_LAYERS)
    assert user_out.shape == (USER_NUM, EMBED_DIM)
    assert item_out.shape == (ITEM_NUM, EMBED_DIM)
    assert jnp.allclose(user_out, ref_user, atol=2e-2, rtol=2e-2)
    assert jnp.allclose(item_out, ref_item, atol=2e-2, rtol=2e-2)

    print("KERNEL_OK")
</pallas_src>

<mosaic_0001>
module attributes {stable_mosaic.version = 11 : i64} {
  func.func @_hgnn_fused_kernel(%arg0: memref<256x256xbf16, #tpu.memory_space<vmem>>, %arg1: memref<256x128xbf16, #tpu.memory_space<vmem>>, %arg2: memref<256x128xf32, #tpu.memory_space<vmem>>, %arg3: memref<256x128xbf16, #tpu.memory_space<vmem>>) attributes {dimension_semantics = [], scalar_prefetch = 0 : i64, scratch_operands = 1 : i64, tpu.core_type = #tpu.core_type<tc>} {
    %c0 = arith.constant 0 : index
    %c0_0 = arith.constant 0 : index
    %0 = vector.load %arg1[%c0, %c0_0] : memref<256x128xbf16, #tpu.memory_space<vmem>>, vector<256x128xbf16>
    %c0_1 = arith.constant 0 : index
    %c0_2 = arith.constant 0 : index
    %1 = vector.load %arg3[%c0_1, %c0_2] : memref<256x128xbf16, #tpu.memory_space<vmem>>, vector<256x128xbf16>
    tpu.vector_store %arg3[%c0_1, %c0_2], %0 {strides = array<i32>} : memref<256x128xbf16, #tpu.memory_space<vmem>>, vector<256x128xbf16>,
    %c0_3 = arith.constant 0 : index
    %c0_4 = arith.constant 0 : index
    %2 = vector.load %arg1[%c0_3, %c0_4] : memref<256x128xbf16, #tpu.memory_space<vmem>>, vector<256x128xbf16>
    %3 = arith.extf %2 : vector<256x128xbf16> to vector<256x128xf32>
    %c0_5 = arith.constant 0 : index
    %c0_6 = arith.constant 0 : index
    %4 = vector.load %arg2[%c0_5, %c0_6] : memref<256x128xf32, #tpu.memory_space<vmem>>, vector<256x128xf32>
    tpu.vector_store %arg2[%c0_5, %c0_6], %3 {strides = array<i32>} : memref<256x128xf32, #tpu.memory_space<vmem>>, vector<256x128xf32>,
    %c0_7 = arith.constant 0 : index
    %c0_8 = arith.constant 0 : index
    %5 = vector.load %arg0[%c0_7, %c0_8] : memref<256x256xbf16, #tpu.memory_space<vmem>>, vector<256x256xbf16>
    %c0_9 = arith.constant 0 : index
    %c0_10 = arith.constant 0 : index
    %6 = vector.load %arg3[%c0_9, %c0_10] : memref<256x128xbf16, #tpu.memory_space<vmem>>, vector<256x128xbf16>
    %cst = arith.constant dense<0.000000e+00> : vector<256x128xf32>
    %7 = tpu.matmul %5, %6, %cst {dimension_numbers = #tpu.dot_dimension_numbers<[1], [0], [0], [1], [0, 0, 1, 1], [], []>} : vector<256x256xbf16>, vector<256x128xbf16>, vector<256x128xf32> -> vector<256x128xf32>
    %c0_11 = arith.constant 0 : index
    %c0_12 = arith.constant 0 : index
    %8 = vector.load %arg2[%c0_11, %c0_12] : memref<256x128xf32, #tpu.memory_space<vmem>>, vector<256x128xf32>
    %9 = arith.addf %8, %7 : vector<256x128xf32>
    %c0_13 = arith.constant 0 : index
    %c0_14 = arith.constant 0 : index
    %10 = vector.load %arg2[%c0_13, %c0_14] : memref<256x128xf32, #tpu.memory_space<vmem>>, vector<256x128xf32>
    tpu.vector_store %arg2[%c0_13, %c0_14], %9 {strides = array<i32>} : memref<256x128xf32, #tpu.memory_space<vmem>>, vector<256x128xf32>,
    %11 = arith.truncf %7 : vector<256x128xf32> to vector<256x128xbf16>
    %c0_15 = arith.constant 0 : index
    %c0_16 = arith.constant 0 : index
    %12 = vector.load %arg3[%c0_15, %c0_16] : memref<256x128xbf16, #tpu.memory_space<vmem>>, vector<256x128xbf16>
    tpu.vector_store %arg3[%c0_15, %c0_16], %11 {strides = array<i32>} : memref<256x128xbf16, #tpu.memory_space<vmem>>, vector<256x128xbf16>,
    %c0_17 = arith.constant 0 : index
    %c0_18 = arith.constant 0 : index
    %13 = vector.load %arg0[%c0_17, %c0_18] : memref<256x256xbf16, #tpu.memory_space<vmem>>, vector<256x256xbf16>
    %c0_19 = arith.constant 0 : index
    %c0_20 = arith.constant 0 : index
    %14 = vector.load %arg3[%c0_19, %c0_20] : memref<256x128xbf16, #tpu.memory_space<vmem>>, vector<256x128xbf16>
    %cst_21 = arith.constant dense<0.000000e+00> : vector<256x128xf32>
    %15 = tpu.matmul %13, %14, %cst_21 {dimension_numbers = #tpu.dot_dimension_numbers<[1], [0], [0], [1], [0, 0, 1, 1], [], []>} : vector<256x256xbf16>, vector<256x128xbf16>, vector<256x128xf32> -> vector<256x128xf32>
    %c0_22 = arith.constant 0 : index
    %c0_23 = arith.constant 0 : index
    %16 = vector.load %arg2[%c0_22, %c0_23] : memref<256x128xf32, #tpu.memory_space<vmem>>, vector<256x128xf32>
    %17 = arith.addf %16, %15 : vector<256x128xf32>
    %c0_24 = arith.constant 0 : index
    %c0_25 = arith.constant 0 : index
    %18 = vector.load %arg2[%c0_24, %c0_25] : memref<256x128xf32, #tpu.memory_space<vmem>>, vector<256x128xf32>
    tpu.vector_store %arg2[%c0_24, %c0_25], %17 {strides = array<i32>} : memref<256x128xf32, #tpu.memory_space<vmem>>, vector<256x128xf32>,
    %19 = arith.truncf %15 : vector<256x128xf32> to vector<256x128xbf16>
    %c0_26 = arith.constant 0 : index
    %c0_27 = arith.constant 0 : index
    %20 = vector.load %arg3[%c0_26, %c0_27] : memref<256x128xbf16, #tpu.memory_space<vmem>>, vector<256x128xbf16>
    tpu.vector_store %arg3[%c0_26, %c0_27], %19 {strides = array<i32>} : memref<256x128xbf16, #tpu.memory_space<vmem>>, vector<256x128xbf16>,
    %c0_28 = arith.constant 0 : index
    %c0_29 = arith.constant 0 : index
    %21 = vector.load %arg2[%c0_28, %c0_29] : memref<256x128xf32, #tpu.memory_space<vmem>>, vector<256x128xf32>
    %cst_30 = arith.constant 0.333333343 : f32
    %22 = vector.broadcast %cst_30 : f32 to vector<256x128xf32>
    %23 = arith.mulf %21, %22 : vector<256x128xf32>
    %c0_31 = arith.constant 0 : index
    %c0_32 = arith.constant 0 : index
    %24 = vector.load %arg2[%c0_31, %c0_32] : memref<256x128xf32, #tpu.memory_space<vmem>>, vector<256x128xf32>
    tpu.vector_store %arg2[%c0_31, %c0_32], %23 {strides = array<i32>} : memref<256x128xf32, #tpu.memory_space<vmem>>, vector<256x128xf32>,
    return
  }
}

</mosaic_0001>

<llo_original>
// kernel: heterogeneous_gnn_forward.1
$region0: #{heterogeneous_gnn_forward.1}
  #allocation0 [shape = 'u32[]', space=smem, size = 0x4, offset = 0x4, fixed_abs, tag = 'smem constant byte address 0x4 - core index']
  #allocation1 [shape = 'u32[144,128]{1,0:T(1,128)}', space=vmem, size = 0x12000, scoped, tag = 'internal scratch']
  #allocation2 [shape = 'bf16[256,128]{1,0:T(8,128)(2,1)}', space=vmem, size = 0x10000, scoped, tag = 'scratch operand']
  %s0 = inlined_call_operand.vmem [shape: bf16[256,256], index: 0, kind: input, shape index: {}]
  %s1 = inlined_call_operand.vmem [shape: bf16[256,128], index: 1, kind: input, shape index: {}]
  %s2 = inlined_call_operand.vmem [shape: f32[256,128], index: 2, kind: output, shape index: {}]
  %s3 = sld [smem:[#allocation0]]
  $region18: #{heterogeneous_gnn_forward.1} parent=0
    _
  %s5 = ssub.s32 1, %s3
  %s6 = scalar_select 0, %s5, %s3
  // Predicated region
  $region2: #{heterogeneous_gnn_forward.1} parent=0 // pred_check
    _
  $region3: #{heterogeneous_gnn_forward.1} parent=0 // pred_check_branch
    %8 = sbr.rel (0) target = $region5
  $region4: #{heterogeneous_gnn_forward.1} parent=0 // pred_region
    _
  $region5: #{heterogeneous_gnn_forward.1} parent=0 // pred_fallthru
    _
  // Predicated region
  $region6: #{heterogeneous_gnn_forward.1} parent=0 // pred_check
    _
  $region7: #{heterogeneous_gnn_forward.1} parent=0 // pred_check_branch
    %10 = sbr.rel (0) target = $region9
  $region8: #{heterogeneous_gnn_forward.1} parent=0 // pred_region
    _
  $region9: #{heterogeneous_gnn_forward.1} parent=0 // pred_fallthru
    _
  %v12 = vld [vmem:[%s1] sm:$0xf]
  %v13 = vld [vmem:[%s1 + $0x4] sm:$0xf]
  %v14 = vld [vmem:[%s1 + $0x8] sm:$0xf]
  %v15 = vld [vmem:[%s1 + $0xc] sm:$0xf]
  %v16 = vld [vmem:[%s1 + $0x10] sm:$0xf]
  %v17 = vld [vmem:[%s1 + $0x14] sm:$0xf]
  %v18 = vld [vmem:[%s1 + $0x18] sm:$0xf]
  %v19 = vld [vmem:[%s1 + $0x1c] sm:$0xf]
  %v20 = vld [vmem:[%s1 + $0x20] sm:$0xf]
  %v21 = vld [vmem:[%s1 + $0x24] sm:$0xf]
  %v22 = vld [vmem:[%s1 + $0x28] sm:$0xf]
  %v23 = vld [vmem:[%s1 + $0x2c] sm:$0xf]
  %v24 = vld [vmem:[%s1 + $0x30] sm:$0xf]
  %v25 = vld [vmem:[%s1 + $0x34] sm:$0xf]
  %v26 = vld [vmem:[%s1 + $0x38] sm:$0xf]
  %v27 = vld [vmem:[%s1 + $0x3c] sm:$0xf]
  %v28 = vld [vmem:[%s1 + $0x40] sm:$0xf]
  %v29 = vld [vmem:[%s1 + $0x44] sm:$0xf]
  %v30 = vld [vmem:[%s1 + $0x48] sm:$0xf]
  %v31 = vld [vmem:[%s1 + $0x4c] sm:$0xf]
  %v32 = vld [vmem:[%s1 + $0x50] sm:$0xf]
  %v33 = vld [vmem:[%s1 + $0x54] sm:$0xf]
  %v34 = vld [vmem:[%s1 + $0x58] sm:$0xf]
  %v35 = vld [vmem:[%s1 + $0x5c] sm:$0xf]
  %v36 = vld [vmem:[%s1 + $0x60] sm:$0xf]
  %v37 = vld [vmem:[%s1 + $0x64] sm:$0xf]
  %v38 = vld [vmem:[%s1 + $0x68] sm:$0xf]
  %v39 = vld [vmem:[%s1 + $0x6c] sm:$0xf]
  %v40 = vld [vmem:[%s1 + $0x70] sm:$0xf]
  %v41 = vld [vmem:[%s1 + $0x74] sm:$0xf]
  %v42 = vld [vmem:[%s1 + $0x78] sm:$0xf]
  %v43 = vld [vmem:[%s1 + $0x7c] sm:$0xf]
  %44 = vst [vmem:[#allocation2] sm:$0xf] %v12
  %45 = vst [vmem:[#allocation2 + $0x4] sm:$0xf] %v13
  %46 = vst [vmem:[#allocation2 + $0x8] sm:$0xf] %v14
  %47 = vst [vmem:[#allocation2 + $0xc] sm:$0xf] %v15
  %48 = vst [vmem:[#allocation2 + $0x10] sm:$0xf] %v16
  %49 = vst [vmem:[#allocation2 + $0x14] sm:$0xf] %v17
  %50 = vst [vmem:[#allocation2 + $0x18] sm:$0xf] %v18
  %51 = vst [vmem:[#allocation2 + $0x1c] sm:$0xf] %v19
  %52 = vst [vmem:[#allocation2 + $0x20] sm:$0xf] %v20
  %53 = vst [vmem:[#allocation2 + $0x24] sm:$0xf] %v21
  %54 = vst [vmem:[#allocation2 + $0x28] sm:$0xf] %v22
  %55 = vst [vmem:[#allocation2 + $0x2c] sm:$0xf] %v23
  %56 = vst [vmem:[#allocation2 + $0x30] sm:$0xf] %v24
  %57 = vst [vmem:[#allocation2 + $0x34] sm:$0xf] %v25
  %58 = vst [vmem:[#allocation2 + $0x38] sm:$0xf] %v26
  %59 = vst [vmem:[#allocation2 + $0x3c] sm:$0xf] %v27
  %60 = vst [vmem:[#allocation2 + $0x40] sm:$0xf] %v28
  %61 = vst [vmem:[#allocation2 + $0x44] sm:$0xf] %v29
  %62 = vst [vmem:[#allocation2 + $0x48] sm:$0xf] %v30
  %63 = vst [vmem:[#allocation2 + $0x4c] sm:$0xf] %v31
  %64 = vst [vmem:[#allocation2 + $0x50] sm:$0xf] %v32
  %65 = vst [vmem:[#allocation2 + $0x54] sm:$0xf] %v33
  %66 = vst [vmem:[#allocation2 + $0x58] sm:$0xf] %v34
  %67 = vst [vmem:[#allocation2 + $0x5c] sm:$0xf] %v35
  %68 = vst [vmem:[#allocation2 + $0x60] sm:$0xf] %v36
  %69 = vst [vmem:[#allocation2 + $0x64] sm:$0xf] %v37
  %70 = vst [vmem:[#allocation2 + $0x68] sm:$0xf] %v38
  %71 = vst [vmem:[#allocation2 + $0x6c] sm:$0xf] %v39
  %72 = vst [vmem:[#allocation2 + $0x70] sm:$0xf] %v40
  %73 = vst [vmem:[#allocation2 + $0x74] sm:$0xf] %v41
  %74 = vst [vmem:[#allocation2 + $0x78] sm:$0xf] %v42
  %75 = vst [vmem:[#allocation2 + $0x7c] sm:$0xf] %v43
  %v76 = vld [vmem:[%s1] sm:$0xf]
  %v77 = vld [vmem:[%s1 + $0x4] sm:$0xf]
  %v78 = vld [vmem:[%s1 + $0x8] sm:$0xf]
  %v79 = vld [vmem:[%s1 + $0xc] sm:$0xf]
  %v80 = vld [vmem:[%s1 + $0x10] sm:$0xf]
  %v81 = vld [vmem:[%s1 + $0x14] sm:$0xf]
  %v82 = vld [vmem:[%s1 + $0x18] sm:$0xf]
  %v83 = vld [vmem:[%s1 + $0x1c] sm:$0xf]
  %v84 = vld [vmem:[%s1 + $0x20] sm:$0xf]
  %v85 = vld [vmem:[%s1 + $0x24] sm:$0xf]
  %v86 = vld [vmem:[%s1 + $0x28] sm:$0xf]
  %v87 = vld [vmem:[%s1 + $0x2c] sm:$0xf]
  %v88 = vld [vmem:[%s1 + $0x30] sm:$0xf]
  %v89 = vld [vmem:[%s1 + $0x34] sm:$0xf]
  %v90 = vld [vmem:[%s1 + $0x38] sm:$0xf]
  %v91 = vld [vmem:[%s1 + $0x3c] sm:$0xf]
  %v92 = vld [vmem:[%s1 + $0x40] sm:$0xf]
  %v93 = vld [vmem:[%s1 + $0x44] sm:$0xf]
  %v94 = vld [vmem:[%s1 + $0x48] sm:$0xf]
  %v95 = vld [vmem:[%s1 + $0x4c] sm:$0xf]
  %v96 = vld [vmem:[%s1 + $0x50] sm:$0xf]
  %v97 = vld [vmem:[%s1 + $0x54] sm:$0xf]
  %v98 = vld [vmem:[%s1 + $0x58] sm:$0xf]
  %v99 = vld [vmem:[%s1 + $0x5c] sm:$0xf]
  %v100 = vld [vmem:[%s1 + $0x60] sm:$0xf]
  %v101 = vld [vmem:[%s1 + $0x64] sm:$0xf]
  %v102 = vld [vmem:[%s1 + $0x68] sm:$0xf]
  %v103 = vld [vmem:[%s1 + $0x6c] sm:$0xf]
  %v104 = vld [vmem:[%s1 + $0x70] sm:$0xf]
  %v105 = vld [vmem:[%s1 + $0x74] sm:$0xf]
  %v106 = vld [vmem:[%s1 + $0x78] sm:$0xf]
  %v107 = vld [vmem:[%s1 + $0x7c] sm:$0xf]
  %v108 = vunpack.c.l.bf16 %v76
  %v109 = vunpack.c.l.bf16 %v77
  %v110 = vunpack.c.l.bf16 %v78
  %v111 = vunpack.c.l.bf16 %v79
  %v112 = vunpack.c.l.bf16 %v80
  %v113 = vunpack.c.l.bf16 %v81
  %v114 = vunpack.c.l.bf16 %v82
  %v115 = vunpack.c.l.bf16 %v83
  %v116 = vunpack.c.l.bf16 %v84
  %v117 = vunpack.c.l.bf16 %v85
  %v118 = vunpack.c.l.bf16 %v86
  %v119 = vunpack.c.l.bf16 %v87
  %v120 = vunpack.c.l.bf16 %v88
  %v121 = vunpack.c.l.bf16 %v89
  %v122 = vunpack.c.l.bf16 %v90
  %v123 = vunpack.c.l.bf16 %v91
  %v124 = vunpack.c.l.bf16 %v92
  %v125 = vunpack.c.l.bf16 %v93
  %v126 = vunpack.c.l.bf16 %v94
  %v127 = vunpack.c.l.bf16 %v95
  %v128 = vunpack.c.l.bf16 %v96
  %v129 = vunpack.c.l.bf16 %v97
  %v130 = vunpack.c.l.bf16 %v98
  %v131 = vunpack.c.l.bf16 %v99
  %v132 = vunpack.c.l.bf16 %v100
  %v133 = vunpack.c.l.bf16 %v101
  %v134 = vunpack.c.l.bf16 %v102
  %v135 = vunpack.c.l.bf16 %v103
  %v136 = vunpack.c.l.bf16 %v104
  %v137 = vunpack.c.l.bf16 %v105
  %v138 = vunpack.c.l.bf16 %v106
  %v139 = vunpack.c.l.bf16 %v107
  %140 = vst [vmem:[%s2] sm:$0xff] %v108
  %141 = vst [vmem:[%s2 + $0x8] sm:$0xff] %v109
  %142 = vst [vmem:[%s2 + $0x10] sm:$0xff] %v110
  %143 = vst [vmem:[%s2 + $0x18] sm:$0xff] %v111
  %144 = vst [vmem:[%s2 + $0x20] sm:$0xff] %v112
  %145 = vst [vmem:[%s2 + $0x28] sm:$0xff] %v113
  %146 = vst [vmem:[%s2 + $0x30] sm:$0xff] %v114
  %147 = vst [vmem:[%s2 + $0x38] sm:$0xff] %v115
  %148 = vst [vmem:[%s2 + $0x40] sm:$0xff] %v116
  %149 = vst [vmem:[%s2 + $0x48] sm:$0xff] %v117
  %150 = vst [vmem:[%s2 + $0x50] sm:$0xff] %v118
  %151 = vst [vmem:[%s2 + $0x58] sm:$0xff] %v119
  %152 = vst [vmem:[%s2 + $0x60] sm:$0xff] %v120
  %153 = vst [vmem:[%s2 + $0x68] sm:$0xff] %v121
  %154 = vst [vmem:[%s2 + $0x70] sm:$0xff] %v122
  %155 = vst [vmem:[%s2 + $0x78] sm:$0xff] %v123
  %156 = vst [vmem:[%s2 + $0x80] sm:$0xff] %v124
  %157 = vst [vmem:[%s2 + $0x88] sm:$0xff] %v125
  %158 = vst [vmem:[%s2 + $0x90] sm:$0xff] %v126
  %159 = vst [vmem:[%s2 + $0x98] sm:$0xff] %v127
  %160 = vst [vmem:[%s2 + $0xa0] sm:$0xff] %v128
  %161 = vst [vmem:[%s2 + $0xa8] sm:$0xff] %v129
  %162 = vst [vmem:[%s2 + $0xb0] sm:$0xff] %v130
  %163 = vst [vmem:[%s2 + $0xb8] sm:$0xff] %v131
  %164 = vst [vmem:[%s2 + $0xc0] sm:$0xff] %v132
  %165 = vst [vmem:[%s2 + $0xc8] sm:$0xff] %v133
  %166 = vst [vmem:[%s2 + $0xd0] sm:$0xff] %v134
  %167 = vst [vmem:[%s2 + $0xd8] sm:$0xff] %v135
  %168 = vst [vmem:[%s2 + $0xe0] sm:$0xff] %v136
  %169 = vst [vmem:[%s2 + $0xe8] sm:$0xff] %v137
  %170 = vst [vmem:[%s2 + $0xf0] sm:$0xff] %v138
  %171 = vst [vmem:[%s2 + $0xf8] sm:$0xff] %v139
  %v172 = vld [vmem:[%s0] sm:$0xff]
  %v173 = vld [vmem:[%s0 + $0x8] sm:$0xff]
  %v174 = vld [vmem:[%s0 + $0x10] sm:$0xff]
  %v175 = vld [vmem:[%s0 + $0x18] sm:$0xff]
  %v176 = vld [vmem:[%s0 + $0x20] sm:$0xff]
  %v177 = vld [vmem:[%s0 + $0x28] sm:$0xff]
  %v178 = vld [vmem:[%s0 + $0x30] sm:$0xff]
  %v179 = vld [vmem:[%s0 + $0x38] sm:$0xff]
  %v180 = vld [vmem:[%s0 + $0x40] sm:$0xff]
  %v181 = vld [vmem:[%s0 + $0x48] sm:$0xff]
  %v182 = vld [vmem:[%s0 + $0x50] sm:$0xff]
  %v183 = vld [vmem:[%s0 + $0x58] sm:$0xff]
  %v184 = vld [vmem:[%s0 + $0x60] sm:$0xff]
  %v185 = vld [vmem:[%s0 + $0x68] sm:$0xff]
  %v186 = vld [vmem:[%s0 + $0x70] sm:$0xff]
  %v187 = vld [vmem:[%s0 + $0x78] sm:$0xff]
  %v188 = vld [vmem:[%s0 + $0x80] sm:$0xff]
  %v189 = vld [vmem:[%s0 + $0x88] sm:$0xff]
  %v190 = vld [vmem:[%s0 + $0x90] sm:$0xff]
  %v191 = vld [vmem:[%s0 + $0x98] sm:$0xff]
  %v192 = vld [vmem:[%s0 + $0xa0] sm:$0xff]
  %v193 = vld [vmem:[%s0 + $0xa8] sm:$0xff]
  %v194 = vld [vmem:[%s0 + $0xb0] sm:$0xff]
  %v195 = vld [vmem:[%s0 + $0xb8] sm:$0xff]
  %v196 = vld [vmem:[%s0 + $0xc0] sm:$0xff]
  %v197 = vld [vmem:[%s0 + $0xc8] sm:$0xff]
  %v198 = vld [vmem:[%s0 + $0xd0] sm:$0xff]
  %v199 = vld [vmem:[%s0 + $0xd8] sm:$0xff]
  %v200 = vld [vmem:[%s0 + $0xe0] sm:$0xff]
  %v201 = vld [vmem:[%s0 + $0xe8] sm:$0xff]
  %v202 = vld [vmem:[%s0 + $0xf0] sm:$0xff]
  %v203 = vld [vmem:[%s0 + $0xf8] sm:$0xff]
  %v204 = vld [vmem:[#allocation2] sm:$0xf]
  %v205 = vld [vmem:[#allocation2 + $0x4] sm:$0xf]
  %v206 = vld [vmem:[#allocation2 + $0x8] sm:$0xf]
  %v207 = vld [vmem:[#allocation2 + $0xc] sm:$0xf]
  %v208 = vld [vmem:[#allocation2 + $0x10] sm:$0xf]
  %v209 = vld [vmem:[#allocation2 + $0x14] sm:$0xf]
  %v210 = vld [vmem:[#allocation2 + $0x18] sm:$0xf]
  %v211 = vld [vmem:[#allocation2 + $0x1c] sm:$0xf]
  %v212 = vld [vmem:[#allocation2 + $0x20] sm:$0xf]
  %v213 = vld [vmem:[#allocation2 + $0x24] sm:$0xf]
  %v214 = vld [vmem:[#allocation2 + $0x28] sm:$0xf]
  %v215 = vld [vmem:[#allocation2 + $0x2c] sm:$0xf]
  %v216 = vld [vmem:[#allocation2 + $0x30] sm:$0xf]
  %v217 = vld [vmem:[#allocation2 + $0x34] sm:$0xf]
  %v218 = vld [vmem:[#allocation2 + $0x38] sm:$0xf]
  %v219 = vld [vmem:[#allocation2 + $0x3c] sm:$0xf]
  %v220 = vld [vmem:[#allocation2 + $0x40] sm:$0xf]
  %v221 = vld [vmem:[#allocation2 + $0x44] sm:$0xf]
  %v222 = vld [vmem:[#allocation2 + $0x48] sm:$0xf]
  %v223 = vld [vmem:[#allocation2 + $0x4c] sm:$0xf]
  %v224 = vld [vmem:[#allocation2 + $0x50] sm:$0xf]
  %v225 = vld [vmem:[#allocation2 + $0x54] sm:$0xf]
  %v226 = vld [vmem:[#allocation2 + $0x58] sm:$0xf]
  %v227 = vld [vmem:[#allocation2 + $0x5c] sm:$0xf]
  %v228 = vld [vmem:[#allocation2 + $0x60] sm:$0xf]
  %v229 = vld [vmem:[#allocation2 + $0x64] sm:$0xf]
  %v230 = vld [vmem:[#allocation2 + $0x68] sm:$0xf]
  %v231 = vld [vmem:[#allocation2 + $0x6c] sm:$0xf]
  %v232 = vld [vmem:[#allocation2 + $0x70] sm:$0xf]
  %v233 = vld [vmem:[#allocation2 + $0x74] sm:$0xf]
  %v234 = vld [vmem:[#allocation2 + $0x78] sm:$0xf]
  %v235 = vld [vmem:[#allocation2 + $0x7c] sm:$0xf]
  %v268 = vunpack.c.l.b16 %v172
  %v269 = vunpack.c.h.b16 %v172
  %v270 = vunpack.c.l.b16 %v173
  %v271 = vunpack.c.h.b16 %v173
  %v272 = vunpack.c.l.b16 %v174
  %v273 = vunpack.c.h.b16 %v174
  %v274 = vunpack.c.l.b16 %v175
  %v275 = vunpack.c.h.b16 %v175
  %v276 = vunpack.c.l.b16 %v176
  %v277 = vunpack.c.h.b16 %v176
  %v278 = vunpack.c.l.b16 %v177
  %v279 = vunpack.c.h.b16 %v177
  %v280 = vunpack.c.l.b16 %v178
  %v281 = vunpack.c.h.b16 %v178
  %v282 = vunpack.c.l.b16 %v179
  %v283 = vunpack.c.h.b16 %v179
  %v284 = vunpack.c.l.b16 %v180
  %v285 = vunpack.c.h.b16 %v180
  %v286 = vunpack.c.l.b16 %v181
  %v287 = vunpack.c.h.b16 %v181
  %v288 = vunpack.c.l.b16 %v182
  %v289 = vunpack.c.h.b16 %v182
  %v290 = vunpack.c.l.b16 %v183
  %v291 = vunpack.c.h.b16 %v183
  %v292 = vunpack.c.l.b16 %v184
  %v293 = vunpack.c.h.b16 %v184
  %v294 = vunpack.c.l.b16 %v185
  %v295 = vunpack.c.h.b16 %v185
  %v296 = vunpack.c.l.b16 %v186
  %v297 = vunpack.c.h.b16 %v186
  %v298 = vunpack.c.l.b16 %v187
  %v299 = vunpack.c.h.b16 %v187
  %v300 = vunpack.c.l.b16 %v188
  %v301 = vunpack.c.h.b16 %v188
  %v302 = vunpack.c.l.b16 %v189
  %v303 = vunpack.c.h.b16 %v189
  %v304 = vunpack.c.l.b16 %v190
  %v305 = vunpack.c.h.b16 %v190
  %v306 = vunpack.c.l.b16 %v191
  %v307 = vunpack.c.h.b16 %v191
  %v308 = vunpack.c.l.b16 %v192
  %v309 = vunpack.c.h.b16 %v192
  %v310 = vunpack.c.l.b16 %v193
  %v311 = vunpack.c.h.b16 %v193
  %v312 = vunpack.c.l.b16 %v194
  %v313 = vunpack.c.h.b16 %v194
  %v314 = vunpack.c.l.b16 %v195
  %v315 = vunpack.c.h.b16 %v195
  %v316 = vunpack.c.l.b16 %v196
  %v317 = vunpack.c.h.b16 %v196
  %v318 = vunpack.c.l.b16 %v197
  %v319 = vunpack.c.h.b16 %v197
  %v320 = vunpack.c.l.b16 %v198
  %v321 = vunpack.c.h.b16 %v198
  %v322 = vunpack.c.l.b16 %v199
  %v323 = vunpack.c.h.b16 %v199
  %v324 = vunpack.c.l.b16 %v200
  %v325 = vunpack.c.h.b16 %v200
  %v326 = vunpack.c.l.b16 %v201
  %v327 = vunpack.c.h.b16 %v201
  %v328 = vunpack.c.l.b16 %v202
  %v329 = vunpack.c.h.b16 %v202
  %v330 = vunpack.c.l.b16 %v203
  %v331 = vunpack.c.h.b16 %v203
  %v332 = vpack.c.b16 %v270, %v268
  %v333 = vpack.c.b16 %v271, %v269
  %v334 = vpack.c.b16 %v274, %v272
  %v335 = vpack.c.b16 %v275, %v273
  %v336 = vpack.c.b16 %v278, %v276
  %v337 = vpack.c.b16 %v279, %v277
  %v338 = vpack.c.b16 %v282, %v280
  %v339 = vpack.c.b16 %v283, %v281
  %v340 = vpack.c.b16 %v286, %v284
  %v341 = vpack.c.b16 %v287, %v285
  %v342 = vpack.c.b16 %v290, %v288
  %v343 = vpack.c.b16 %v291, %v289
  %v344 = vpack.c.b16 %v294, %v292
  %v345 = vpack.c.b16 %v295, %v293
  %v346 = vpack.c.b16 %v298, %v296
  %v347 = vpack.c.b16 %v299, %v297
  %v348 = vpack.c.b16 %v302, %v300
  %v349 = vpack.c.b16 %v303, %v301
  %v350 = vpack.c.b16 %v306, %v304
  %v351 = vpack.c.b16 %v307, %v305
  %v352 = vpack.c.b16 %v310, %v308
  %v353 = vpack.c.b16 %v311, %v309
  %v354 = vpack.c.b16 %v314, %v312
  %v355 = vpack.c.b16 %v315, %v313
  %v356 = vpack.c.b16 %v318, %v316
  %v357 = vpack.c.b16 %v319, %v317
  %v358 = vpack.c.b16 %v322, %v320
  %v359 = vpack.c.b16 %v323, %v321
  %v360 = vpack.c.b16 %v326, %v324
  %v361 = vpack.c.b16 %v327, %v325
  %v362 = vpack.c.b16 %v330, %v328
  %v363 = vpack.c.b16 %v331, %v329
  %v428 = vunpack.c.l.b16 %v204
  %v429 = vunpack.c.l.b16 %v205
  %v430 = vunpack.c.l.b16 %v206
  %v431 = vunpack.c.l.b16 %v207
  %v432 = vunpack.c.l.b16 %v208
  %v433 = vunpack.c.l.b16 %v209
  %v434 = vunpack.c.l.b16 %v210
  %v435 = vunpack.c.l.b16 %v211
  %v436 = vunpack.c.l.b16 %v212
  %v437 = vunpack.c.l.b16 %v213
  %v438 = vunpack.c.l.b16 %v214
  %v439 = vunpack.c.l.b16 %v215
  %v440 = vunpack.c.l.b16 %v216
  %v441 = vunpack.c.l.b16 %v217
  %v442 = vunpack.c.l.b16 %v218
  %v443 = vunpack.c.l.b16 %v219
  %v444 = vunpack.c.l.b16 %v220
  %v445 = vunpack.c.l.b16 %v221
  %v446 = vunpack.c.l.b16 %v222
  %v447 = vunpack.c.l.b16 %v223
  %v448 = vunpack.c.l.b16 %v224
  %v449 = vunpack.c.l.b16 %v225
  %v450 = vunpack.c.l.b16 %v226
  %v451 = vunpack.c.l.b16 %v227
  %v452 = vunpack.c.l.b16 %v228
  %v453 = vunpack.c.l.b16 %v229
  %v454 = vunpack.c.l.b16 %v230
  %v455 = vunpack.c.l.b16 %v231
  %v456 = vunpack.c.l.b16 %v232
  %v457 = vunpack.c.l.b16 %v233
  %v458 = vunpack.c.l.b16 %v234
  %v459 = vunpack.c.l.b16 %v235
  %v460 = vpack.c.b16 %v429, %v428
  %v461 = vpack.c.b16 %v431, %v430
  %v462 = vpack.c.b16 %v433, %v432
  %v463 = vpack.c.b16 %v435, %v434
  %v464 = vpack.c.b16 %v437, %v436
  %v465 = vpack.c.b16 %v439, %v438
  %v466 = vpack.c.b16 %v441, %v440
  %v467 = vpack.c.b16 %v443, %v442
  %v468 = vpack.c.b16 %v445, %v444
  %v469 = vpack.c.b16 %v447, %v446
  %v470 = vpack.c.b16 %v449, %v448
  %v471 = vpack.c.b16 %v451, %v450
  %v472 = vpack.c.b16 %v453, %v452
  %v473 = vpack.c.b16 %v455, %v454
  %v474 = vpack.c.b16 %v457, %v456
  %v475 = vpack.c.b16 %v459, %v458
  %492 = vmatprep.subr.bf16.mxu0 0
  %493 = vmatpush1.bf16.msra.mxu0 %v467
  %494 = vmatprep.subr.bf16.mxu0 0
  %495 = vmatpush1.bf16.msra.mxu0 %v466
  %496 = vmatprep.subr.bf16.mxu0 0
  %497 = vmatpush1.bf16.msra.mxu0 %v465
  %498 = vmatprep.subr.bf16.mxu0 0
  %499 = vmatpush1.bf16.msra.mxu0 %v464
  %500 = vmatprep.subr.bf16.mxu0 0
  %501 = vmatpush1.bf16.msra.mxu0 %v463
  %502 = vmatprep.subr.bf16.mxu0 0
  %503 = vmatpush1.bf16.msra.mxu0 %v462
  %504 = vmatprep.subr.bf16.mxu0 0
  %505 = vmatpush1.bf16.msra.mxu0 %v461
  %506 = vmatprep.subr.bf16.mxu0 0
  %507 = vmatpush1.bf16.msra.mxu0 %v460
  %508 = vmatprep.subr.bf16.mxu0 0
  %509 = vmatpush2.bf16.msra.mxu0 %v475
  %510 = vmatprep.subr.bf16.mxu0 0
  %511 = vmatpush2.bf16.msra.mxu0 %v474
  %512 = vmatprep.subr.bf16.mxu0 0
  %513 = vmatpush2.bf16.msra.mxu0 %v473
  %514 = vmatprep.subr.bf16.mxu0 0
  %515 = vmatpush2.bf16.msra.mxu0 %v472
  %516 = vmatprep.subr.bf16.mxu0 0
  %517 = vmatpush2.bf16.msra.mxu0 %v471
  %518 = vmatprep.subr.bf16.mxu0 0
  %519 = vmatpush2.bf16.msra.mxu0 %v470
  %520 = vmatprep.subr.bf16.mxu0 0
  %521 = vmatpush2.bf16.msra.mxu0 %v469
  %522 = vmatprep.subr.bf16.mxu0 0
  %523 = vmatpush2.bf16.msra.mxu0 %v468
  %524 = vmatprep.mubr.bf16.mxu0 %v333
  %525 = vmatmul.mubr.bf16.gmra.mxu0 %v332
  %v526 = vpop.f32.mrf.mxu0
  %v527 = vadd.f32 0.0, %v526
  %v528 = vpop.f32.mrf.mxu0
  %v529 = vpop.f32.mrf.mxu0
  %v530 = vadd.f32 0.0, %v529
  %v531 = vpop.f32.mrf.mxu0
  %532 = vmatprep.mubr.bf16.mxu0 %v335
  %533 = vmatmul.mubr.bf16.gmra.mxu0 %v334
  %v534 = vpop.f32.mrf.mxu0
  %v535 = vadd.f32 0.0, %v534
  %v536 = vpop.f32.mrf.mxu0
  %v537 = vpop.f32.mrf.mxu0
  %v538 = vadd.f32 0.0, %v537
  %v539 = vpop.f32.mrf.mxu0
  %540 = vmatprep.mubr.bf16.mxu0 %v337
  %541 = vmatmul.mubr.bf16.gmra.mxu0 %v336
  %v542 = vpop.f32.mrf.mxu0
  %v543 = vadd.f32 0.0, %v542
  %v544 = vpop.f32.mrf.mxu0
  %v545 = vpop.f32.mrf.mxu0
  %v546 = vadd.f32 0.0, %v545
  %v547 = vpop.f32.mrf.mxu0
  %548 = vmatprep.mubr.bf16.mxu0 %v339
  %549 = vmatmul.mubr.bf16.gmra.mxu0 %v338
  %v550 = vpop.f32.mrf.mxu0
  %v551 = vadd.f32 0.0, %v550
  %v552 = vpop.f32.mrf.mxu0
  %v553 = vpop.f32.mrf.mxu0
  %v554 = vadd.f32 0.0, %v553
  %v555 = vpop.f32.mrf.mxu0
  %556 = vmatprep.mubr.bf16.mxu0 %v341
  %557 = vmatmul.mubr.bf16.gmra.mxu0 %v340
  %v558 = vpop.f32.mrf.mxu0
  %v559 = vadd.f32 0.0, %v558
  %v560 = vpop.f32.mrf.mxu0
  %v561 = vpop.f32.mrf.mxu0
  %v562 = vadd.f32 0.0, %v561
  %v563 = vpop.f32.mrf.mxu0
  %564 = vmatprep.mubr.bf16.mxu0 %v343
  %565 = vmatmul.mubr.bf16.gmra.mxu0 %v342
  %v566 = vpop.f32.mrf.mxu0
  %v567 = vadd.f32 0.0, %v566
  %v568 = vpop.f32.mrf.mxu0
  %v569 = vpop.f32.mrf.mxu0
  %v570 = vadd.f32 0.0, %v569
  %v571 = vpop.f32.mrf.mxu0
  %572 = vmatprep.mubr.bf16.mxu0 %v345
  %573 = vmatmul.mubr.bf16.gmra.mxu0 %v344
  %v574 = vpop.f32.mrf.mxu0
  %v575 = vadd.f32 0.0, %v574
  %v576 = vpop.f32.mrf.mxu0
  %v577 = vpop.f32.mrf.mxu0
  %v578 = vadd.f32 0.0, %v577
  %v579 = vpop.f32.mrf.mxu0
  %580 = vmatprep.mubr.bf16.mxu0 %v347
  %581 = vmatmul.mubr.bf16.gmra.mxu0 %v346
  %v582 = vpop.f32.mrf.mxu0
  %v583 = vadd.f32 0.0, %v582
  %v584 = vpop.f32.mrf.mxu0
  %v585 = vpop.f32.mrf.mxu0
  %v586 = vadd.f32 0.0, %v585
  %v587 = vpop.f32.mrf.mxu0
  %588 = vmatprep.mubr.bf16.mxu0 %v349
  %589 = vmatmul.mubr.bf16.gmra.mxu0 %v348
  %v590 = vpop.f32.mrf.mxu0
  %v591 = vadd.f32 0.0, %v590
  %v592 = vpop.f32.mrf.mxu0
  %v593 = vpop.f32.mrf.mxu0
  %v594 = vadd.f32 0.0, %v593
  %v595 = vpop.f32.mrf.mxu0
  %596 = vmatprep.mubr.bf16.mxu0 %v351
  %597 = vmatmul.mubr.bf16.gmra.mxu0 %v350
  %v598 = vpop.f32.mrf.mxu0
  %v599 = vadd.f32 0.0, %v598
  %v600 = vpop.f32.mrf.mxu0
  %v601 = vpop.f32.mrf.mxu0
  %v602 = vadd.f32 0.0, %v601
  %v603 = vpop.f32.mrf.mxu0
  %604 = vmatprep.mubr.bf16.mxu0 %v353
  %605 = vmatmul.mubr.bf16.gmra.mxu0 %v352
  %v606 = vpop.f32.mrf.mxu0
  %v607 = vadd.f32 0.0, %v606
  %v608 = vpop.f32.mrf.mxu0
  %v609 = vpop.f32.mrf.mxu0
  %v610 = vadd.f32 0.0, %v609
  %v611 = vpop.f32.mrf.mxu0
  %612 = vmatprep.mubr.bf16.mxu0 %v355
  %613 = vmatmul.mubr.bf16.gmra.mxu0 %v354
  %v614 = vpop.f32.mrf.mxu0
  %v615 = vadd.f32 0.0, %v614
  %v616 = vpop.f32.mrf.mxu0
  %v617 = vpop.f32.mrf.mxu0
  %v618 = vadd.f32 0.0, %v617
  %v619 = vpop.f32.mrf.mxu0
  %620 = vmatprep.mubr.bf16.mxu0 %v357
  %621 = vmatmul.mubr.bf16.gmra.mxu0 %v356
  %v622 = vpop.f32.mrf.mxu0
  %v623 = vadd.f32 0.0, %v622
  %v624 = vpop.f32.mrf.mxu0
  %v625 = vpop.f32.mrf.mxu0
  %v626 = vadd.f32 0.0, %v625
  %v627 = vpop.f32.mrf.mxu0
  %628 = vmatprep.mubr.bf16.mxu0 %v359
  %629 = vmatmul.mubr.bf16.gmra.mxu0 %v358
  %v630 = vpop.f32.mrf.mxu0
  %v631 = vadd.f32 0.0, %v630
  %v632 = vpop.f32.mrf.mxu0
  %v633 = vpop.f32.mrf.mxu0
  %v634 = vadd.f32 0.0, %v633
  %v635 = vpop.f32.mrf.mxu0
  %636 = vmatprep.mubr.bf16.mxu0 %v361
  %637 = vmatmul.mubr.bf16.gmra.mxu0 %v360
  %v638 = vpop.f32.mrf.mxu0
  %v639 = vadd.f32 0.0, %v638
  %v640 = vpop.f32.mrf.mxu0
  %v641 = vpop.f32.mrf.mxu0
  %v642 = vadd.f32 0.0, %v641
  %v643 = vpop.f32.mrf.mxu0
  %644 = vmatprep.mubr.bf16.mxu0 %v363
  %645 = vmatmul.mubr.bf16.gmra.mxu0 %v362
  %v646 = vpop.f32.mrf.mxu0
  %v647 = vadd.f32 0.0, %v646
  %v648 = vpop.f32.mrf.mxu0
  %v649 = vpop.f32.mrf.mxu0
  %v650 = vadd.f32 0.0, %v649
  %v651 = vpop.f32.mrf.mxu0
  %652 = vdwg.mxu0
  %v653 = vld [vmem:[%s2] sm:$0xff]
  %v654 = vld [vmem:[%s2 + $0x8] sm:$0xff]
  %v655 = vld [vmem:[%s2 + $0x10] sm:$0xff]
  %v656 = vld [vmem:[%s2 + $0x18] sm:$0xff]
  %v657 = vld [vmem:[%s2 + $0x20] sm:$0xff]
  %v658 = vld [vmem:[%s2 + $0x28] sm:$0xff]
  %v659 = vld [vmem:[%s2 + $0x30] sm:$0xff]
  %v660 = vld [vmem:[%s2 + $0x38] sm:$0xff]
  %v661 = vld [vmem:[%s2 + $0x40] sm:$0xff]
  %v662 = vld [vmem:[%s2 + $0x48] sm:$0xff]
  %v663 = vld [vmem:[%s2 + $0x50] sm:$0xff]
  %v664 = vld [vmem:[%s2 + $0x58] sm:$0xff]
  %v665 = vld [vmem:[%s2 + $0x60] sm:$0xff]
  %v666 = vld [vmem:[%s2 + $0x68] sm:$0xff]
  %v667 = vld [vmem:[%s2 + $0x70] sm:$0xff]
  %v668 = vld [vmem:[%s2 + $0x78] sm:$0xff]
  %v669 = vld [vmem:[%s2 + $0x80] sm:$0xff]
  %v670 = vld [vmem:[%s2 + $0x88] sm:$0xff]
  %v671 = vld [vmem:[%s2 + $0x90] sm:$0xff]
  %v672 = vld [vmem:[%s2 + $0x98] sm:$0xff]
  %v673 = vld [vmem:[%s2 + $0xa0] sm:$0xff]
  %v674 = vld [vmem:[%s2 + $0xa8] sm:$0xff]
  %v675 = vld [vmem:[%s2 + $0xb0] sm:$0xff]
  %v676 = vld [vmem:[%s2 + $0xb8] sm:$0xff]
  %v677 = vld [vmem:[%s2 + $0xc0] sm:$0xff]
  %v678 = vld [vmem:[%s2 + $0xc8] sm:$0xff]
  %v679 = vld [vmem:[%s2 + $0xd0] sm:$0xff]
  %v680 = vld [vmem:[%s2 + $0xd8] sm:$0xff]
  %v681 = vld [vmem:[%s2 + $0xe0] sm:$0xff]
  %v682 = vld [vmem:[%s2 + $0xe8] sm:$0xff]
  %v683 = vld [vmem:[%s2 + $0xf0] sm:$0xff]
  %v684 = vld [vmem:[%s2 + $0xf8] sm:$0xff]
  %v685 = vadd.f32 %v653, %v527
  %v686 = vadd.f32 %v654, %v530
  %v687 = vadd.f32 %v655, %v535
  %v688 = vadd.f32 %v656, %v538
  %v689 = vadd.f32 %v657, %v543
  %v690 = vadd.f32 %v658, %v546
  %v691 = vadd.f32 %v659, %v551
  %v692 = vadd.f32 %v660, %v554
  %v693 = vadd.f32 %v661, %v559
  %v694 = vadd.f32 %v662, %v562
  %v695 = vadd.f32 %v663, %v567
  %v696 = vadd.f32 %v664, %v570
  %v697 = vadd.f32 %v665, %v575
  %v698 = vadd.f32 %v666, %v578
  %v699 = vadd.f32 %v667, %v583
  %v700 = vadd.f32 %v668, %v586
  %v701 = vadd.f32 %v669, %v591
  %v702 = vadd.f32 %v670, %v594
  %v703 = vadd.f32 %v671, %v599
  %v704 = vadd.f32 %v672, %v602
  %v705 = vadd.f32 %v673, %v607
  %v706 = vadd.f32 %v674, %v610
  %v707 = vadd.f32 %v675, %v615
  %v708 = vadd.f32 %v676, %v618
  %v709 = vadd.f32 %v677, %v623
  %v710 = vadd.f32 %v678, %v626
  %v711 = vadd.f32 %v679, %v631
  %v712 = vadd.f32 %v680, %v634
  %v713 = vadd.f32 %v681, %v639
  %v714 = vadd.f32 %v682, %v642
  %v715 = vadd.f32 %v683, %v647
  %v716 = vadd.f32 %v684, %v650
  %717 = vst [vmem:[%s2] sm:$0xff] %v685
  %718 = vst [vmem:[%s2 + $0x8] sm:$0xff] %v686
  %719 = vst [vmem:[%s2 + $0x10] sm:$0xff] %v687
  %720 = vst [vmem:[%s2 + $0x18] sm:$0xff] %v688
  %721 = vst [vmem:[%s2 + $0x20] sm:$0xff] %v689
  %722 = vst [vmem:[%s2 + $0x28] sm:$0xff] %v690
  %723 = vst [vmem:[%s2 + $0x30] sm:$0xff] %v691
  %724 = vst [vmem:[%s2 + $0x38] sm:$0xff] %v692
  %725 = vst [vmem:[%s2 + $0x40] sm:$0xff] %v693
  %726 = vst [vmem:[%s2 + $0x48] sm:$0xff] %v694
  %727 = vst [vmem:[%s2 + $0x50] sm:$0xff] %v695
  %728 = vst [vmem:[%s2 + $0x58] sm:$0xff] %v696
  %729 = vst [vmem:[%s2 + $0x60] sm:$0xff] %v697
  %730 = vst [vmem:[%s2 + $0x68] sm:$0xff] %v698
  %731 = vst [vmem:[%s2 + $0x70] sm:$0xff] %v699
  %732 = vst [vmem:[%s2 + $0x78] sm:$0xff] %v700
  %733 = vst [vmem:[%s2 + $0x80] sm:$0xff] %v701
  %734 = vst [vmem:[%s2 + $0x88] sm:$0xff] %v702
  %735 = vst [vmem:[%s2 + $0x90] sm:$0xff] %v703
  %736 = vst [vmem:[%s2 + $0x98] sm:$0xff] %v704
  %737 = vst [vmem:[%s2 + $0xa0] sm:$0xff] %v705
  %738 = vst [vmem:[%s2 + $0xa8] sm:$0xff] %v706
  %739 = vst [vmem:[%s2 + $0xb0] sm:$0xff] %v707
  %740 = vst [vmem:[%s2 + $0xb8] sm:$0xff] %v708
  %741 = vst [vmem:[%s2 + $0xc0] sm:$0xff] %v709
  %742 = vst [vmem:[%s2 + $0xc8] sm:$0xff] %v710
  %743 = vst [vmem:[%s2 + $0xd0] sm:$0xff] %v711
  %744 = vst [vmem:[%s2 + $0xd8] sm:$0xff] %v712
  %745 = vst [vmem:[%s2 + $0xe0] sm:$0xff] %v713
  %746 = vst [vmem:[%s2 + $0xe8] sm:$0xff] %v714
  %747 = vst [vmem:[%s2 + $0xf0] sm:$0xff] %v715
  %748 = vst [vmem:[%s2 + $0xf8] sm:$0xff] %v716
  %v749 = vpack.c.bf16 %v530, %v527
  %v750 = vpack.c.bf16 %v538, %v535
  %v751 = vpack.c.bf16 %v546, %v543
  %v752 = vpack.c.bf16 %v554, %v551
  %v753 = vpack.c.bf16 %v562, %v559
  %v754 = vpack.c.bf16 %v570, %v567
  %v755 = vpack.c.bf16 %v578, %v575
  %v756 = vpack.c.bf16 %v586, %v583
  %v757 = vpack.c.bf16 %v594, %v591
  %v758 = vpack.c.bf16 %v602, %v599
  %v759 = vpack.c.bf16 %v610, %v607
  %v760 = vpack.c.bf16 %v618, %v615
  %v761 = vpack.c.bf16 %v626, %v623
  %v762 = vpack.c.bf16 %v634, %v631
  %v763 = vpack.c.bf16 %v642, %v639
  %v764 = vpack.c.bf16 %v650, %v647
  %v781 = vunpack.c.l.b16 %v749
  %v782 = vunpack.c.h.b16 %v749
  %v783 = vunpack.c.l.b16 %v750
  %v784 = vunpack.c.h.b16 %v750
  %v785 = vunpack.c.l.b16 %v751
  %v786 = vunpack.c.h.b16 %v751
  %v787 = vunpack.c.l.b16 %v752
  %v788 = vunpack.c.h.b16 %v752
  %v789 = vunpack.c.l.b16 %v753
  %v790 = vunpack.c.h.b16 %v753
  %v791 = vunpack.c.l.b16 %v754
  %v792 = vunpack.c.h.b16 %v754
  %v793 = vunpack.c.l.b16 %v755
  %v794 = vunpack.c.h.b16 %v755
  %v795 = vunpack.c.l.b16 %v756
  %v796 = vunpack.c.h.b16 %v756
  %v797 = vunpack.c.l.b16 %v757
  %v798 = vunpack.c.h.b16 %v757
  %v799 = vunpack.c.l.b16 %v758
  %v800 = vunpack.c.h.b16 %v758
  %v801 = vunpack.c.l.b16 %v759
  %v802 = vunpack.c.h.b16 %v759
  %v803 = vunpack.c.l.b16 %v760
  %v804 = vunpack.c.h.b16 %v760
  %v805 = vunpack.c.l.b16 %v761
  %v806 = vunpack.c.h.b16 %v761
  %v807 = vunpack.c.l.b16 %v762
  %v808 = vunpack.c.h.b16 %v762
  %v809 = vunpack.c.l.b16 %v763
  %v810 = vunpack.c.h.b16 %v763
  %v811 = vunpack.c.l.b16 %v764
  %v812 = vunpack.c.h.b16 %v764
  %v813 = vpack.c.b16 %v781, %v781
  %v814 = vpack.c.b16 %v782, %v782
  %v815 = vpack.c.b16 %v783, %v783
  %v816 = vpack.c.b16 %v784, %v784
  %v817 = vpack.c.b16 %v785, %v785
  %v818 = vpack.c.b16 %v786, %v786
  %v819 = vpack.c.b16 %v787, %v787
  %v820 = vpack.c.b16 %v788, %v788
  %v821 = vpack.c.b16 %v789, %v789
  %v822 = vpack.c.b16 %v790, %v790
  %v823 = vpack.c.b16 %v791, %v791
  %v824 = vpack.c.b16 %v792, %v792
  %v825 = vpack.c.b16 %v793, %v793
  %v826 = vpack.c.b16 %v794, %v794
  %v827 = vpack.c.b16 %v795, %v795
  %v828 = vpack.c.b16 %v796, %v796
  %v829 = vpack.c.b16 %v797, %v797
  %v830 = vpack.c.b16 %v798, %v798
  %v831 = vpack.c.b16 %v799, %v799
  %v832 = vpack.c.b16 %v800, %v800
  %v833 = vpack.c.b16 %v801, %v801
  %v834 = vpack.c.b16 %v802, %v802
  %v835 = vpack.c.b16 %v803, %v803
  %v836 = vpack.c.b16 %v804, %v804
  %v837 = vpack.c.b16 %v805, %v805
  %v838 = vpack.c.b16 %v806, %v806
  %v839 = vpack.c.b16 %v807, %v807
  %v840 = vpack.c.b16 %v808, %v808
  %v841 = vpack.c.b16 %v809, %v809
  %v842 = vpack.c.b16 %v810, %v810
  %v843 = vpack.c.b16 %v811, %v811
  %v844 = vpack.c.b16 %v812, %v812
  %877 = vst [vmem:[#allocation2] sm:$0xf] %v813
  %878 = vst [vmem:[#allocation2 + $0x4] sm:$0xf] %v814
  %879 = vst [vmem:[#allocation2 + $0x8] sm:$0xf] %v815
  %880 = vst [vmem:[#allocation2 + $0xc] sm:$0xf] %v816
  %881 = vst [vmem:[#allocation2 + $0x10] sm:$0xf] %v817
  %882 = vst [vmem:[#allocation2 + $0x14] sm:$0xf] %v818
  %883 = vst [vmem:[#allocation2 + $0x18] sm:$0xf] %v819
  %884 = vst [vmem:[#allocation2 + $0x1c] sm:$0xf] %v820
  %885 = vst [vmem:[#allocation2 + $0x20] sm:$0xf] %v821
  %886 = vst [vmem:[#allocation2 + $0x24] sm:$0xf] %v822
  %887 = vst [vmem:[#allocation2 + $0x28] sm:$0xf] %v823
  %888 = vst [vmem:[#allocation2 + $0x2c] sm:$0xf] %v824
  %889 = vst [vmem:[#allocation2 + $0x30] sm:$0xf] %v825
  %890 = vst [vmem:[#allocation2 + $0x34] sm:$0xf] %v826
  %891 = vst [vmem:[#allocation2 + $0x38] sm:$0xf] %v827
  %892 = vst [vmem:[#allocation2 + $0x3c] sm:$0xf] %v828
  %893 = vst [vmem:[#allocation2 + $0x40] sm:$0xf] %v829
  %894 = vst [vmem:[#allocation2 + $0x44] sm:$0xf] %v830
  %895 = vst [vmem:[#allocation2 + $0x48] sm:$0xf] %v831
  %896 = vst [vmem:[#allocation2 + $0x4c] sm:$0xf] %v832
  %897 = vst [vmem:[#allocation2 + $0x50] sm:$0xf] %v833
  %898 = vst [vmem:[#allocation2 + $0x54] sm:$0xf] %v834
  %899 = vst [vmem:[#allocation2 + $0x58] sm:$0xf] %v835
  %900 = vst [vmem:[#allocation2 + $0x5c] sm:$0xf] %v836
  %901 = vst [vmem:[#allocation2 + $0x60] sm:$0xf] %v837
  %902 = vst [vmem:[#allocation2 + $0x64] sm:$0xf] %v838
  %903 = vst [vmem:[#allocation2 + $0x68] sm:$0xf] %v839
  %904 = vst [vmem:[#allocation2 + $0x6c] sm:$0xf] %v840
  %905 = vst [vmem:[#allocation2 + $0x70] sm:$0xf] %v841
  %906 = vst [vmem:[#allocation2 + $0x74] sm:$0xf] %v842
  %907 = vst [vmem:[#allocation2 + $0x78] sm:$0xf] %v843
  %908 = vst [vmem:[#allocation2 + $0x7c] sm:$0xf] %v844
  %v909 = vld [vmem:[%s0] sm:$0xff]
  %v910 = vld [vmem:[%s0 + $0x8] sm:$0xff]
  %v911 = vld [vmem:[%s0 + $0x10] sm:$0xff]
  %v912 = vld [vmem:[%s0 + $0x18] sm:$0xff]
  %v913 = vld [vmem:[%s0 + $0x20] sm:$0xff]
  %v914 = vld [vmem:[%s0 + $0x28] sm:$0xff]
  %v915 = vld [vmem:[%s0 + $0x30] sm:$0xff]
  %v916 = vld [vmem:[%s0 + $0x38] sm:$0xff]
  %v917 = vld [vmem:[%s0 + $0x40] sm:$0xff]
  %v918 = vld [vmem:[%s0 + $0x48] sm:$0xff]
  %v919 = vld [vmem:[%s0 + $0x50] sm:$0xff]
  %v920 = vld [vmem:[%s0 + $0x58] sm:$0xff]
  %v921 = vld [vmem:[%s0 + $0x60] sm:$0xff]
  %v922 = vld [vmem:[%s0 + $0x68] sm:$0xff]
  %v923 = vld [vmem:[%s0 + $0x70] sm:$0xff]
  %v924 = vld [vmem:[%s0 + $0x78] sm:$0xff]
  %v925 = vld [vmem:[%s0 + $0x80] sm:$0xff]
  %v926 = vld [vmem:[%s0 + $0x88] sm:$0xff]
  %v927 = vld [vmem:[%s0 + $0x90] sm:$0xff]
  %v928 = vld [vmem:[%s0 + $0x98] sm:$0xff]
  %v929 = vld [vmem:[%s0 + $0xa0] sm:$0xff]
  %v930 = vld [vmem:[%s0 + $0xa8] sm:$0xff]
  %v931 = vld [vmem:[%s0 + $0xb0] sm:$0xff]
  %v932 = vld [vmem:[%s0 + $0xb8] sm:$0xff]
  %v933 = vld [vmem:[%s0 + $0xc0] sm:$0xff]
  %v934 = vld [vmem:[%s0 + $0xc8] sm:$0xff]
  %v935 = vld [vmem:[%s0 + $0xd0] sm:$0xff]
  %v936 = vld [vmem:[%s0 + $0xd8] sm:$0xff]
  %v937 = vld [vmem:[%s0 + $0xe0] sm:$0xff]
  %v938 = vld [vmem:[%s0 + $0xe8] sm:$0xff]
  %v939 = vld [vmem:[%s0 + $0xf0] sm:$0xff]
  %v940 = vld [vmem:[%s0 + $0xf8] sm:$0xff]
  %v941 = vld [vmem:[#allocation2] sm:$0xf]
  %v942 = vld [vmem:[#allocation2 + $0x4] sm:$0xf]
  %v943 = vld [vmem:[#allocation2 + $0x8] sm:$0xf]
  %v944 = vld [vmem:[#allocation2 + $0xc] sm:$0xf]
  %v945 = vld [vmem:[#allocation2 + $0x10] sm:$0xf]
  %v946 = vld [vmem:[#allocation2 + $0x14] sm:$0xf]
  %v947 = vld [vmem:[#allocation2 + $0x18] sm:$0xf]
  %v948 = vld [vmem:[#allocation2 + $0x1c] sm:$0xf]
  %v949 = vld [vmem:[#allocation2 + $0x20] sm:$0xf]
  %v950 = vld [vmem:[#allocation2 + $0x24] sm:$0xf]
  %v951 = vld [vmem:[#allocation2 + $0x28] sm:$0xf]
  %v952 = vld [vmem:[#allocation2 + $0x2c] sm:$0xf]
  %v953 = vld [vmem:[#allocation2 + $0x30] sm:$0xf]
  %v954 = vld [vmem:[#allocation2 + $0x34] sm:$0xf]
  %v955 = vld [vmem:[#allocation2 + $0x38] sm:$0xf]
  %v956 = vld [vmem:[#allocation2 + $0x3c] sm:$0xf]
  %v957 = vld [vmem:[#allocation2 + $0x40] sm:$0xf]
  %v958 = vld [vmem:[#allocation2 + $0x44] sm:$0xf]
  %v959 = vld [vmem:[#allocation2 + $0x48] sm:$0xf]
  %v960 = vld [vmem:[#allocation2 + $0x4c] sm:$0xf]
  %v961 = vld [vmem:[#allocation2 + $0x50] sm:$0xf]
  %v962 = vld [vmem:[#allocation2 + $0x54] sm:$0xf]
  %v963 = vld [vmem:[#allocation2 + $0x58] sm:$0xf]
  %v964 = vld [vmem:[#allocation2 + $0x5c] sm:$0xf]
  %v965 = vld [vmem:[#allocation2 + $0x60] sm:$0xf]
  %v966 = vld [vmem:[#allocation2 + $0x64] sm:$0xf]
  %v967 = vld [vmem:[#allocation2 + $0x68] sm:$0xf]
  %v968 = vld [vmem:[#allocation2 + $0x6c] sm:$0xf]
  %v969 = vld [vmem:[#allocation2 + $0x70] sm:$0xf]
  %v970 = vld [vmem:[#allocation2 + $0x74] sm:$0xf]
  %v971 = vld [vmem:[#allocation2 + $0x78] sm:$0xf]
  %v972 = vld [vmem:[#allocation2 + $0x7c] sm:$0xf]
  %v1005 = vunpack.c.l.b16 %v909
  %v1006 = vunpack.c.h.b16 %v909
  %v1007 = vunpack.c.l.b16 %v910
  %v1008 = vunpack.c.h.b16 %v910
  %v1009 = vunpack.c.l.b16 %v911
  %v1010 = vunpack.c.h.b16 %v911
  %v1011 = vunpack.c.l.b16 %v912
  %v1012 = vunpack.c.h.b16 %v912
  %v1013 = vunpack.c.l.b16 %v913
  %v1014 = vunpack.c.h.b16 %v913
  %v1015 = vunpack.c.l.b16 %v914
  %v1016 = vunpack.c.h.b16 %v914
  %v1017 = vunpack.c.l.b16 %v915
  %v1018 = vunpack.c.h.b16 %v915
  %v1019 = vunpack.c.l.b16 %v916
  %v1020 = vunpack.c.h.b16 %v916
  %v1021 = vunpack.c.l.b16 %v917
  %v1022 = vunpack.c.h.b16 %v917
  %v1023 = vunpack.c.l.b16 %v918
  %v1024 = vunpack.c.h.b16 %v918
  %v1025 = vunpack.c.l.b16 %v919
  %v1026 = vunpack.c.h.b16 %v919
  %v1027 = vunpack.c.l.b16 %v920
  %v1028 = vunpack.c.h.b16 %v920
  %v1029 = vunpack.c.l.b16 %v921
  %v1030 = vunpack.c.h.b16 %v921
  %v1031 = vunpack.c.l.b16 %v922
  %v1032 = vunpack.c.h.b16 %v922
  %v1033 = vunpack.c.l.b16 %v923
  %v1034 = vunpack.c.h.b16 %v923
  %v1035 = vunpack.c.l.b16 %v924
  %v1036 = vunpack.c.h.b16 %v924
  %v1037 = vunpack.c.l.b16 %v925
  %v1038 = vunpack.c.h.b16 %v925
  %v1039 = vunpack.c.l.b16 %v926
  %v1040 = vunpack.c.h.b16 %v926
  %v1041 = vunpack.c.l.b16 %v927
  %v1042 = vunpack.c.h.b16 %v927
  %v1043 = vunpack.c.l.b16 %v928
  %v1044 = vunpack.c.h.b16 %v928
  %v1045 = vunpack.c.l.b16 %v929
  %v1046 = vunpack.c.h.b16 %v929
  %v1047 = vunpack.c.l.b16 %v930
  %v1048 = vunpack.c.h.b16 %v930
  %v1049 = vunpack.c.l.b16 %v931
  %v1050 = vunpack.c.h.b16 %v931
  %v1051 = vunpack.c.l.b16 %v932
  %v1052 = vunpack.c.h.b16 %v932
  %v1053 = vunpack.c.l.b16 %v933
  %v1054 = vunpack.c.h.b16 %v933
  %v1055 = vunpack.c.l.b16 %v934
  %v1056 = vunpack.c.h.b16 %v934
  %v1057 = vunpack.c.l.b16 %v935
  %v1058 = vunpack.c.h.b16 %v935
  %v1059 = vunpack.c.l.b16 %v936
  %v1060 = vunpack.c.h.b16 %v936
  %v1061 = vunpack.c.l.b16 %v937
  %v1062 = vunpack.c.h.b16 %v937
  %v1063 = vunpack.c.l.b16 %v938
  %v1064 = vunpack.c.h.b16 %v938
  %v1065 = vunpack.c.l.b16 %v939
  %v1066 = vunpack.c.h.b16 %v939
  %v1067 = vunpack.c.l.b16 %v940
  %v1068 = vunpack.c.h.b16 %v940
  %v1069 = vpack.c.b16 %v1007, %v1005
  %v1070 = vpack.c.b16 %v1008, %v1006
  %v1071 = vpack.c.b16 %v1011, %v1009
  %v1072 = vpack.c.b16 %v1012, %v1010
  %v1073 = vpack.c.b16 %v1015, %v1013
  %v1074 = vpack.c.b16 %v1016, %v1014
  %v1075 = vpack.c.b16 %v1019, %v1017
  %v1076 = vpack.c.b16 %v1020, %v1018
  %v1077 = vpack.c.b16 %v1023, %v1021
  %v1078 = vpack.c.b16 %v1024, %v1022
  %v1079 = vpack.c.b16 %v1027, %v1025
  %v1080 = vpack.c.b16 %v1028, %v1026
  %v1081 = vpack.c.b16 %v1031, %v1029
  %v1082 = vpack.c.b16 %v1032, %v1030
  %v1083 = vpack.c.b16 %v1035, %v1033
  %v1084 = vpack.c.b16 %v1036, %v1034
  %v1085 = vpack.c.b16 %v1039, %v1037
  %v1086 = vpack.c.b16 %v1040, %v1038
  %v1087 = vpack.c.b16 %v1043, %v1041
  %v1088 = vpack.c.b16 %v1044, %v1042
  %v1089 = vpack.c.b16 %v1047, %v1045
  %v1090 = vpack.c.b16 %v1048, %v1046
  %v1091 = vpack.c.b16 %v1051, %v1049
  %v1092 = vpack.c.b16 %v1052, %v1050
  %v1093 = vpack.c.b16 %v1055, %v1053
  %v1094 = vpack.c.b16 %v1056, %v1054
  %v1095 = vpack.c.b16 %v1059, %v1057
  %v1096 = vpack.c.b16 %v1060, %v1058
  %v1097 = vpack.c.b16 %v1063, %v1061
  %v1098 = vpack.c.b16 %v1064, %v1062
  %v1099 = vpack.c.b16 %v1067, %v1065
  %v1100 = vpack.c.b16 %v1068, %v1066
  %v1165 = vunpack.c.l.b16 %v941
  %v1166 = vunpack.c.l.b16 %v942
  %v1167 = vunpack.c.l.b16 %v943
  %v1168 = vunpack.c.l.b16 %v944
  %v1169 = vunpack.c.l.b16 %v945
  %v1170 = vunpack.c.l.b16 %v946
  %v1171 = vunpack.c.l.b16 %v947
  %v1172 = vunpack.c.l.b16 %v948
  %v1173 = vunpack.c.l.b16 %v949
  %v1174 = vunpack.c.l.b16 %v950
  %v1175 = vunpack.c.l.b16 %v951
  %v1176 = vunpack.c.l.b16 %v952
  %v1177 = vunpack.c.l.b16 %v953
  %v1178 = vunpack.c.l.b16 %v954
  %v1179 = vunpack.c.l.b16 %v955
  %v1180 = vunpack.c.l.b16 %v956
  %v1181 = vunpack.c.l.b16 %v957
  %v1182 = vunpack.c.l.b16 %v958
  %v1183 = vunpack.c.l.b16 %v959
  %v1184 = vunpack.c.l.b16 %v960
  %v1185 = vunpack.c.l.b16 %v961
  %v1186 = vunpack.c.l.b16 %v962
  %v1187 = vunpack.c.l.b16 %v963
  %v1188 = vunpack.c.l.b16 %v964
  %v1189 = vunpack.c.l.b16 %v965
  %v1190 = vunpack.c.l.b16 %v966
  %v1191 = vunpack.c.l.b16 %v967
  %v1192 = vunpack.c.l.b16 %v968
  %v1193 = vunpack.c.l.b16 %v969
  %v1194 = vunpack.c.l.b16 %v970
  %v1195 = vunpack.c.l.b16 %v971
  %v1196 = vunpack.c.l.b16 %v972
  %v1197 = vpack.c.b16 %v1166, %v1165
  %v1198 = vpack.c.b16 %v1168, %v1167
  %v1199 = vpack.c.b16 %v1170, %v1169
  %v1200 = vpack.c.b16 %v1172, %v1171
  %v1201 = vpack.c.b16 %v1174, %v1173
  %v1202 = vpack.c.b16 %v1176, %v1175
  %v1203 = vpack.c.b16 %v1178, %v1177
  %v1204 = vpack.c.b16 %v1180, %v1179
  %v1205 = vpack.c.b16 %v1182, %v1181
  %v1206 = vpack.c.b16 %v1184, %v1183
  %v1207 = vpack.c.b16 %v1186, %v1185
  %v1208 = vpack.c.b16 %v1188, %v1187
  %v1209 = vpack.c.b16 %v1190, %v1189
  %v1210 = vpack.c.b16 %v1192, %v1191
  %v1211 = vpack.c.b16 %v1194, %v1193
  %v1212 = vpack.c.b16 %v1196, %v1195
  %1229 = vmatprep.subr.bf16.mxu0 0
  %1230 = vmatpush1.bf16.msra.mxu0 %v1204
  %1231 = vmatprep.subr.bf16.mxu0 0
  %1232 = vmatpush1.bf16.msra.mxu0 %v1203
  %1233 = vmatprep.subr.bf16.mxu0 0
  %1234 = vmatpush1.bf16.msra.mxu0 %v1202
  %1235 = vmatprep.subr.bf16.mxu0 0
  %1236 = vmatpush1.bf16.msra.mxu0 %v1201
  %1237 = vmatprep.subr.bf16.mxu0 0
  %1238 = vmatpush1.bf16.msra.mxu0 %v1200
  %1239 = vmatprep.subr.bf16.mxu0 0
  %1240 = vmatpush1.bf16.msra.mxu0 %v1199
  %1241 = vmatprep.subr.bf16.mxu0 0
  %1242 = vmatpush1.bf16.msra.mxu0 %v1198
  %1243 = vmatprep.subr.bf16.mxu0 0
  %1244 = vmatpush1.bf16.msra.mxu0 %v1197
  %1245 = vmatprep.subr.bf16.mxu0 0
  %1246 = vmatpush2.bf16.msra.mxu0 %v1212
  %1247 = vmatprep.subr.bf16.mxu0 0
  %1248 = vmatpush2.bf16.msra.mxu0 %v1211
  %1249 = vmatprep.subr.bf16.mxu0 0
  %1250 = vmatpush2.bf16.msra.mxu0 %v1210
  %1251 = vmatprep.subr.bf16.mxu0 0
  %1252 = vmatpush2.bf16.msra.mxu0 %v1209
  %1253 = vmatprep.subr.bf16.mxu0 0
  %1254 = vmatpush2.bf16.msra.mxu0 %v1208
  %1255 = vmatprep.subr.bf16.mxu0 0
  %1256 = vmatpush2.bf16.msra.mxu0 %v1207
  %1257 = vmatprep.subr.bf16.mxu0 0
  %1258 = vmatpush2.bf16.msra.mxu0 %v1206
  %1259 = vmatprep.subr.bf16.mxu0 0
  %1260 = vmatpush2.bf16.msra.mxu0 %v1205
  %1261 = vmatprep.mubr.bf16.mxu0 %v1070
  %1262 = vmatmul.mubr.bf16.gmra.mxu0 %v1069
  %v1263 = vpop.f32.mrf.mxu0
  %v1264 = vadd.f32 0.0, %v1263
  %v1265 = vpop.f32.mrf.mxu0
  %v1266 = vpop.f32.mrf.mxu0
  %v1267 = vadd.f32 0.0, %v1266
  %v1268 = vpop.f32.mrf.mxu0
  %1269 = vmatprep.mubr.bf16.mxu0 %v1072
  %1270 = vmatmul.mubr.bf16.gmra.mxu0 %v1071
  %v1271 = vpop.f32.mrf.mxu0
  %v1272 = vadd.f32 0.0, %v1271
  %v1273 = vpop.f32.mrf.mxu0
  %v1274 = vpop.f32.mrf.mxu0
  %v1275 = vadd.f32 0.0, %v1274
  %v1276 = vpop.f32.mrf.mxu0
  %1277 = vmatprep.mubr.bf16.mxu0 %v1074
  %1278 = vmatmul.mubr.bf16.gmra.mxu0 %v1073
  %v1279 = vpop.f32.mrf.mxu0
  %v1280 = vadd.f32 0.0, %v1279
  %v1281 = vpop.f32.mrf.mxu0
  %v1282 = vpop.f32.mrf.mxu0
  %v1283 = vadd.f32 0.0, %v1282
  %v1284 = vpop.f32.mrf.mxu0
  %1285 = vmatprep.mubr.bf16.mxu0 %v1076
  %1286 = vmatmul.mubr.bf16.gmra.mxu0 %v1075
  %v1287 = vpop.f32.mrf.mxu0
  %v1288 = vadd.f32 0.0, %v1287
  %v1289 = vpop.f32.mrf.mxu0
  %v1290 = vpop.f32.mrf.mxu0
  %v1291 = vadd.f32 0.0, %v1290
  %v1292 = vpop.f32.mrf.mxu0
  %1293 = vmatprep.mubr.bf16.mxu0 %v1078
  %1294 = vmatmul.mubr.bf16.gmra.mxu0 %v1077
  %v1295 = vpop.f32.mrf.mxu0
  %v1296 = vadd.f32 0.0, %v1295
  %v1297 = vpop.f32.mrf.mxu0
  %v1298 = vpop.f32.mrf.mxu0
  %v1299 = vadd.f32 0.0, %v1298
  %v1300 = vpop.f32.mrf.mxu0
  %1301 = vmatprep.mubr.bf16.mxu0 %v1080
  %1302 = vmatmul.mubr.bf16.gmra.mxu0 %v1079
  %v1303 = vpop.f32.mrf.mxu0
  %v1304 = vadd.f32 0.0, %v1303
  %v1305 = vpop.f32.mrf.mxu0
  %v1306 = vpop.f32.mrf.mxu0
  %v1307 = vadd.f32 0.0, %v1306
  %v1308 = vpop.f32.mrf.mxu0
  %1309 = vmatprep.mubr.bf16.mxu0 %v1082
  %1310 = vmatmul.mubr.bf16.gmra.mxu0 %v1081
  %v1311 = vpop.f32.mrf.mxu0
  %v1312 = vadd.f32 0.0, %v1311
  %v1313 = vpop.f32.mrf.mxu0
  %v1314 = vpop.f32.mrf.mxu0
  %v1315 = vadd.f32 0.0, %v1314
  %v1316 = vpop.f32.mrf.mxu0
  %1317 = vmatprep.mubr.bf16.mxu0 %v1084
  %1318 = vmatmul.mubr.bf16.gmra.mxu0 %v1083
  %v1319 = vpop.f32.mrf.mxu0
  %v1320 = vadd.f32 0.0, %v1319
  %v1321 = vpop.f32.mrf.mxu0
  %v1322 = vpop.f32.mrf.mxu0
  %v1323 = vadd.f32 0.0, %v1322
  %v1324 = vpop.f32.mrf.mxu0
  %1325 = vmatprep.mubr.bf16.mxu0 %v1086
  %1326 = vmatmul.mubr.bf16.gmra.mxu0 %v1085
  %v1327 = vpop.f32.mrf.mxu0
  %v1328 = vadd.f32 0.0, %v1327
  %v1329 = vpop.f32.mrf.mxu0
  %v1330 = vpop.f32.mrf.mxu0
  %v1331 = vadd.f32 0.0, %v1330
  %v1332 = vpop.f32.mrf.mxu0
  %1333 = vmatprep.mubr.bf16.mxu0 %v1088
  %1334 = vmatmul.mubr.bf16.gmra.mxu0 %v1087
  %v1335 = vpop.f32.mrf.mxu0
  %v1336 = vadd.f32 0.0, %v1335
  %v1337 = vpop.f32.mrf.mxu0
  %v1338 = vpop.f32.mrf.mxu0
  %v1339 = vadd.f32 0.0, %v1338
  %v1340 = vpop.f32.mrf.mxu0
  %1341 = vmatprep.mubr.bf16.mxu0 %v1090
  %1342 = vmatmul.mubr.bf16.gmra.mxu0 %v1089
  %v1343 = vpop.f32.mrf.mxu0
  %v1344 = vadd.f32 0.0, %v1343
  %v1345 = vpop.f32.mrf.mxu0
  %v1346 = vpop.f32.mrf.mxu0
  %v1347 = vadd.f32 0.0, %v1346
  %v1348 = vpop.f32.mrf.mxu0
  %1349 = vmatprep.mubr.bf16.mxu0 %v1092
  %1350 = vmatmul.mubr.bf16.gmra.mxu0 %v1091
  %v1351 = vpop.f32.mrf.mxu0
  %v1352 = vadd.f32 0.0, %v1351
  %v1353 = vpop.f32.mrf.mxu0
  %v1354 = vpop.f32.mrf.mxu0
  %v1355 = vadd.f32 0.0, %v1354
  %v1356 = vpop.f32.mrf.mxu0
  %1357 = vmatprep.mubr.bf16.mxu0 %v1094
  %1358 = vmatmul.mubr.bf16.gmra.mxu0 %v1093
  %v1359 = vpop.f32.mrf.mxu0
  %v1360 = vadd.f32 0.0, %v1359
  %v1361 = vpop.f32.mrf.mxu0
  %v1362 = vpop.f32.mrf.mxu0
  %v1363 = vadd.f32 0.0, %v1362
  %v1364 = vpop.f32.mrf.mxu0
  %1365 = vmatprep.mubr.bf16.mxu0 %v1096
  %1366 = vmatmul.mubr.bf16.gmra.mxu0 %v1095
  %v1367 = vpop.f32.mrf.mxu0
  %v1368 = vadd.f32 0.0, %v1367
  %v1369 = vpop.f32.mrf.mxu0
  %v1370 = vpop.f32.mrf.mxu0
  %v1371 = vadd.f32 0.0, %v1370
  %v1372 = vpop.f32.mrf.mxu0
  %1373 = vmatprep.mubr.bf16.mxu0 %v1098
  %1374 = vmatmul.mubr.bf16.gmra.mxu0 %v1097
  %v1375 = vpop.f32.mrf.mxu0
  %v1376 = vadd.f32 0.0, %v1375
  %v1377 = vpop.f32.mrf.mxu0
  %v1378 = vpop.f32.mrf.mxu0
  %v1379 = vadd.f32 0.0, %v1378
  %v1380 = vpop.f32.mrf.mxu0
  %1381 = vmatprep.mubr.bf16.mxu0 %v1100
  %1382 = vmatmul.mubr.bf16.gmra.mxu0 %v1099
  %v1383 = vpop.f32.mrf.mxu0
  %v1384 = vadd.f32 0.0, %v1383
  %v1385 = vpop.f32.mrf.mxu0
  %v1386 = vpop.f32.mrf.mxu0
  %v1387 = vadd.f32 0.0, %v1386
  %v1388 = vpop.f32.mrf.mxu0
  %1389 = vdwg.mxu0
  %v1390 = vld [vmem:[%s2] sm:$0xff]
  %v1391 = vld [vmem:[%s2 + $0x8] sm:$0xff]
  %v1392 = vld [vmem:[%s2 + $0x10] sm:$0xff]
  %v1393 = vld [vmem:[%s2 + $0x18] sm:$0xff]
  %v1394 = vld [vmem:[%s2 + $0x20] sm:$0xff]
  %v1395 = vld [vmem:[%s2 + $0x28] sm:$0xff]
  %v1396 = vld [vmem:[%s2 + $0x30] sm:$0xff]
  %v1397 = vld [vmem:[%s2 + $0x38] sm:$0xff]
  %v1398 = vld [vmem:[%s2 + $0x40] sm:$0xff]
  %v1399 = vld [vmem:[%s2 + $0x48] sm:$0xff]
  %v1400 = vld [vmem:[%s2 + $0x50] sm:$0xff]
  %v1401 = vld [vmem:[%s2 + $0x58] sm:$0xff]
  %v1402 = vld [vmem:[%s2 + $0x60] sm:$0xff]
  %v1403 = vld [vmem:[%s2 + $0x68] sm:$0xff]
  %v1404 = vld [vmem:[%s2 + $0x70] sm:$0xff]
  %v1405 = vld [vmem:[%s2 + $0x78] sm:$0xff]
  %v1406 = vld [vmem:[%s2 + $0x80] sm:$0xff]
  %v1407 = vld [vmem:[%s2 + $0x88] sm:$0xff]
  %v1408 = vld [vmem:[%s2 + $0x90] sm:$0xff]
  %v1409 = vld [vmem:[%s2 + $0x98] sm:$0xff]
  %v1410 = vld [vmem:[%s2 + $0xa0] sm:$0xff]
  %v1411 = vld [vmem:[%s2 + $0xa8] sm:$0xff]
  %v1412 = vld [vmem:[%s2 + $0xb0] sm:$0xff]
  %v1413 = vld [vmem:[%s2 + $0xb8] sm:$0xff]
  %v1414 = vld [vmem:[%s2 + $0xc0] sm:$0xff]
  %v1415 = vld [vmem:[%s2 + $0xc8] sm:$0xff]
  %v1416 = vld [vmem:[%s2 + $0xd0] sm:$0xff]
  %v1417 = vld [vmem:[%s2 + $0xd8] sm:$0xff]
  %v1418 = vld [vmem:[%s2 + $0xe0] sm:$0xff]
  %v1419 = vld [vmem:[%s2 + $0xe8] sm:$0xff]
  %v1420 = vld [vmem:[%s2 + $0xf0] sm:$0xff]
  %v1421 = vld [vmem:[%s2 + $0xf8] sm:$0xff]
  %v1422 = vadd.f32 %v1390, %v1264
  %v1423 = vadd.f32 %v1391, %v1267
  %v1424 = vadd.f32 %v1392, %v1272
  %v1425 = vadd.f32 %v1393, %v1275
  %v1426 = vadd.f32 %v1394, %v1280
  %v1427 = vadd.f32 %v1395, %v1283
  %v1428 = vadd.f32 %v1396, %v1288
  %v1429 = vadd.f32 %v1397, %v1291
  %v1430 = vadd.f32 %v1398, %v1296
  %v1431 = vadd.f32 %v1399, %v1299
  %v1432 = vadd.f32 %v1400, %v1304
  %v1433 = vadd.f32 %v1401, %v1307
  %v1434 = vadd.f32 %v1402, %v1312
  %v1435 = vadd.f32 %v1403, %v1315
  %v1436 = vadd.f32 %v1404, %v1320
  %v1437 = vadd.f32 %v1405, %v1323
  %v1438 = vadd.f32 %v1406, %v1328
  %v1439 = vadd.f32 %v1407, %v1331
  %v1440 = vadd.f32 %v1408, %v1336
  %v1441 = vadd.f32 %v1409, %v1339
  %v1442 = vadd.f32 %v1410, %v1344
  %v1443 = vadd.f32 %v1411, %v1347
  %v1444 = vadd.f32 %v1412, %v1352
  %v1445 = vadd.f32 %v1413, %v1355
  %v1446 = vadd.f32 %v1414, %v1360
  %v1447 = vadd.f32 %v1415, %v1363
  %v1448 = vadd.f32 %v1416, %v1368
  %v1449 = vadd.f32 %v1417, %v1371
  %v1450 = vadd.f32 %v1418, %v1376
  %v1451 = vadd.f32 %v1419, %v1379
  %v1452 = vadd.f32 %v1420, %v1384
  %v1453 = vadd.f32 %v1421, %v1387
  %1454 = vst [vmem:[%s2] sm:$0xff] %v1422
  %1455 = vst [vmem:[%s2 + $0x8] sm:$0xff] %v1423
  %1456 = vst [vmem:[%s2 + $0x10] sm:$0xff] %v1424
  %1457 = vst [vmem:[%s2 + $0x18] sm:$0xff] %v1425
  %1458 = vst [vmem:[%s2 + $0x20] sm:$0xff] %v1426
  %1459 = vst [vmem:[%s2 + $0x28] sm:$0xff] %v1427
  %1460 = vst [vmem:[%s2 + $0x30] sm:$0xff] %v1428
  %1461 = vst [vmem:[%s2 + $0x38] sm:$0xff] %v1429
  %1462 = vst [vmem:[%s2 + $0x40] sm:$0xff] %v1430
  %1463 = vst [vmem:[%s2 + $0x48] sm:$0xff] %v1431
  %1464 = vst [vmem:[%s2 + $0x50] sm:$0xff] %v1432
  %1465 = vst [vmem:[%s2 + $0x58] sm:$0xff] %v1433
  %1466 = vst [vmem:[%s2 + $0x60] sm:$0xff] %v1434
  %1467 = vst [vmem:[%s2 + $0x68] sm:$0xff] %v1435
  %1468 = vst [vmem:[%s2 + $0x70] sm:$0xff] %v1436
  %1469 = vst [vmem:[%s2 + $0x78] sm:$0xff] %v1437
  %1470 = vst [vmem:[%s2 + $0x80] sm:$0xff] %v1438
  %1471 = vst [vmem:[%s2 + $0x88] sm:$0xff] %v1439
  %1472 = vst [vmem:[%s2 + $0x90] sm:$0xff] %v1440
  %1473 = vst [vmem:[%s2 + $0x98] sm:$0xff] %v1441
  %1474 = vst [vmem:[%s2 + $0xa0] sm:$0xff] %v1442
  %1475 = vst [vmem:[%s2 + $0xa8] sm:$0xff] %v1443
  %1476 = vst [vmem:[%s2 + $0xb0] sm:$0xff] %v1444
  %1477 = vst [vmem:[%s2 + $0xb8] sm:$0xff] %v1445
  %1478 = vst [vmem:[%s2 + $0xc0] sm:$0xff] %v1446
  %1479 = vst [vmem:[%s2 + $0xc8] sm:$0xff] %v1447
  %1480 = vst [vmem:[%s2 + $0xd0] sm:$0xff] %v1448
  %1481 = vst [vmem:[%s2 + $0xd8] sm:$0xff] %v1449
  %1482 = vst [vmem:[%s2 + $0xe0] sm:$0xff] %v1450
  %1483 = vst [vmem:[%s2 + $0xe8] sm:$0xff] %v1451
  %1484 = vst [vmem:[%s2 + $0xf0] sm:$0xff] %v1452
  %1485 = vst [vmem:[%s2 + $0xf8] sm:$0xff] %v1453
  %v1486 = vpack.c.bf16 %v1267, %v1264
  %v1487 = vpack.c.bf16 %v1275, %v1272
  %v1488 = vpack.c.bf16 %v1283, %v1280
  %v1489 = vpack.c.bf16 %v1291, %v1288
  %v1490 = vpack.c.bf16 %v1299, %v1296
  %v1491 = vpack.c.bf16 %v1307, %v1304
  %v1492 = vpack.c.bf16 %v1315, %v1312
  %v1493 = vpack.c.bf16 %v1323, %v1320
  %v1494 = vpack.c.bf16 %v1331, %v1328
  %v1495 = vpack.c.bf16 %v1339, %v1336
  %v1496 = vpack.c.bf16 %v1347, %v1344
  %v1497 = vpack.c.bf16 %v1355, %v1352
  %v1498 = vpack.c.bf16 %v1363, %v1360
  %v1499 = vpack.c.bf16 %v1371, %v1368
  %v1500 = vpack.c.bf16 %v1379, %v1376
  %v1501 = vpack.c.bf16 %v1387, %v1384
  %v1518 = vunpack.c.l.b16 %v1486
  %v1519 = vunpack.c.h.b16 %v1486
  %v1520 = vunpack.c.l.b16 %v1487
  %v1521 = vunpack.c.h.b16 %v1487
  %v1522 = vunpack.c.l.b16 %v1488
  %v1523 = vunpack.c.h.b16 %v1488
  %v1524 = vunpack.c.l.b16 %v1489
  %v1525 = vunpack.c.h.b16 %v1489
  %v1526 = vunpack.c.l.b16 %v1490
  %v1527 = vunpack.c.h.b16 %v1490
  %v1528 = vunpack.c.l.b16 %v1491
  %v1529 = vunpack.c.h.b16 %v1491
  %v1530 = vunpack.c.l.b16 %v1492
  %v1531 = vunpack.c.h.b16 %v1492
  %v1532 = vunpack.c.l.b16 %v1493
  %v1533 = vunpack.c.h.b16 %v1493
  %v1534 = vunpack.c.l.b16 %v1494
  %v1535 = vunpack.c.h.b16 %v1494
  %v1536 = vunpack.c.l.b16 %v1495
  %v1537 = vunpack.c.h.b16 %v1495
  %v1538 = vunpack.c.l.b16 %v1496
  %v1539 = vunpack.c.h.b16 %v1496
  %v1540 = vunpack.c.l.b16 %v1497
  %v1541 = vunpack.c.h.b16 %v1497
  %v1542 = vunpack.c.l.b16 %v1498
  %v1543 = vunpack.c.h.b16 %v1498
  %v1544 = vunpack.c.l.b16 %v1499
  %v1545 = vunpack.c.h.b16 %v1499
  %v1546 = vunpack.c.l.b16 %v1500
  %v1547 = vunpack.c.h.b16 %v1500
  %v1548 = vunpack.c.l.b16 %v1501
  %v1549 = vunpack.c.h.b16 %v1501
  %v1550 = vpack.c.b16 %v1518, %v1518
  %v1551 = vpack.c.b16 %v1519, %v1519
  %v1552 = vpack.c.b16 %v1520, %v1520
  %v1553 = vpack.c.b16 %v1521, %v1521
  %v1554 = vpack.c.b16 %v1522, %v1522
  %v1555 = vpack.c.b16 %v1523, %v1523
  %v1556 = vpack.c.b16 %v1524, %v1524
  %v1557 = vpack.c.b16 %v1525, %v1525
  %v1558 = vpack.c.b16 %v1526, %v1526
  %v1559 = vpack.c.b16 %v1527, %v1527
  %v1560 = vpack.c.b16 %v1528, %v1528
  %v1561 = vpack.c.b16 %v1529, %v1529
  %v1562 = vpack.c.b16 %v1530, %v1530
  %v1563 = vpack.c.b16 %v1531, %v1531
  %v1564 = vpack.c.b16 %v1532, %v1532
  %v1565 = vpack.c.b16 %v1533, %v1533
  %v1566 = vpack.c.b16 %v1534, %v1534
  %v1567 = vpack.c.b16 %v1535, %v1535
  %v1568 = vpack.c.b16 %v1536, %v1536
  %v1569 = vpack.c.b16 %v1537, %v1537
  %v1570 = vpack.c.b16 %v1538, %v1538
  %v1571 = vpack.c.b16 %v1539, %v1539
  %v1572 = vpack.c.b16 %v1540, %v1540
  %v1573 = vpack.c.b16 %v1541, %v1541
  %v1574 = vpack.c.b16 %v1542, %v1542
  %v1575 = vpack.c.b16 %v1543, %v1543
  %v1576 = vpack.c.b16 %v1544, %v1544
  %v1577 = vpack.c.b16 %v1545, %v1545
  %v1578 = vpack.c.b16 %v1546, %v1546
  %v1579 = vpack.c.b16 %v1547, %v1547
  %v1580 = vpack.c.b16 %v1548, %v1548
  %v1581 = vpack.c.b16 %v1549, %v1549
  %1614 = vst [vmem:[#allocation2] sm:$0xf] %v1550
  %1615 = vst [vmem:[#allocation2 + $0x4] sm:$0xf] %v1551
  %1616 = vst [vmem:[#allocation2 + $0x8] sm:$0xf] %v1552
  %1617 = vst [vmem:[#allocation2 + $0xc] sm:$0xf] %v1553
  %1618 = vst [vmem:[#allocation2 + $0x10] sm:$0xf] %v1554
  %1619 = vst [vmem:[#allocation2 + $0x14] sm:$0xf] %v1555
  %1620 = vst [vmem:[#allocation2 + $0x18] sm:$0xf] %v1556
  %1621 = vst [vmem:[#allocation2 + $0x1c] sm:$0xf] %v1557
  %1622 = vst [vmem:[#allocation2 + $0x20] sm:$0xf] %v1558
  %1623 = vst [vmem:[#allocation2 + $0x24] sm:$0xf] %v1559
  %1624 = vst [vmem:[#allocation2 + $0x28] sm:$0xf] %v1560
  %1625 = vst [vmem:[#allocation2 + $0x2c] sm:$0xf] %v1561
  %1626 = vst [vmem:[#allocation2 + $0x30] sm:$0xf] %v1562
  %1627 = vst [vmem:[#allocation2 + $0x34] sm:$0xf] %v1563
  %1628 = vst [vmem:[#allocation2 + $0x38] sm:$0xf] %v1564
  %1629 = vst [vmem:[#allocation2 + $0x3c] sm:$0xf] %v1565
  %1630 = vst [vmem:[#allocation2 + $0x40] sm:$0xf] %v1566
  %1631 = vst [vmem:[#allocation2 + $0x44] sm:$0xf] %v1567
  %1632 = vst [vmem:[#allocation2 + $0x48] sm:$0xf] %v1568
  %1633 = vst [vmem:[#allocation2 + $0x4c] sm:$0xf] %v1569
  %1634 = vst [vmem:[#allocation2 + $0x50] sm:$0xf] %v1570
  %1635 = vst [vmem:[#allocation2 + $0x54] sm:$0xf] %v1571
  %1636 = vst [vmem:[#allocation2 + $0x58] sm:$0xf] %v1572
  %1637 = vst [vmem:[#allocation2 + $0x5c] sm:$0xf] %v1573
  %1638 = vst [vmem:[#allocation2 + $0x60] sm:$0xf] %v1574
  %1639 = vst [vmem:[#allocation2 + $0x64] sm:$0xf] %v1575
  %1640 = vst [vmem:[#allocation2 + $0x68] sm:$0xf] %v1576
  %1641 = vst [vmem:[#allocation2 + $0x6c] sm:$0xf] %v1577
  %1642 = vst [vmem:[#allocation2 + $0x70] sm:$0xf] %v1578
  %1643 = vst [vmem:[#allocation2 + $0x74] sm:$0xf] %v1579
  %1644 = vst [vmem:[#allocation2 + $0x78] sm:$0xf] %v1580
  %1645 = vst [vmem:[#allocation2 + $0x7c] sm:$0xf] %v1581
  %v1646 = vld [vmem:[%s2] sm:$0xff]
  %v1647 = vld [vmem:[%s2 + $0x8] sm:$0xff]
  %v1648 = vld [vmem:[%s2 + $0x10] sm:$0xff]
  %v1649 = vld [vmem:[%s2 + $0x18] sm:$0xff]
  %v1650 = vld [vmem:[%s2 + $0x20] sm:$0xff]
  %v1651 = vld [vmem:[%s2 + $0x28] sm:$0xff]
  %v1652 = vld [vmem:[%s2 + $0x30] sm:$0xff]
  %v1653 = vld [vmem:[%s2 + $0x38] sm:$0xff]
  %v1654 = vld [vmem:[%s2 + $0x40] sm:$0xff]
  %v1655 = vld [vmem:[%s2 + $0x48] sm:$0xff]
  %v1656 = vld [vmem:[%s2 + $0x50] sm:$0xff]
  %v1657 = vld [vmem:[%s2 + $0x58] sm:$0xff]
  %v1658 = vld [vmem:[%s2 + $0x60] sm:$0xff]
  %v1659 = vld [vmem:[%s2 + $0x68] sm:$0xff]
  %v1660 = vld [vmem:[%s2 + $0x70] sm:$0xff]
  %v1661 = vld [vmem:[%s2 + $0x78] sm:$0xff]
  %v1662 = vld [vmem:[%s2 + $0x80] sm:$0xff]
  %v1663 = vld [vmem:[%s2 + $0x88] sm:$0xff]
  %v1664 = vld [vmem:[%s2 + $0x90] sm:$0xff]
  %v1665 = vld [vmem:[%s2 + $0x98] sm:$0xff]
  %v1666 = vld [vmem:[%s2 + $0xa0] sm:$0xff]
  %v1667 = vld [vmem:[%s2 + $0xa8] sm:$0xff]
  %v1668 = vld [vmem:[%s2 + $0xb0] sm:$0xff]
  %v1669 = vld [vmem:[%s2 + $0xb8] sm:$0xff]
  %v1670 = vld [vmem:[%s2 + $0xc0] sm:$0xff]
  %v1671 = vld [vmem:[%s2 + $0xc8] sm:$0xff]
  %v1672 = vld [vmem:[%s2 + $0xd0] sm:$0xff]
  %v1673 = vld [vmem:[%s2 + $0xd8] sm:$0xff]
  %v1674 = vld [vmem:[%s2 + $0xe0] sm:$0xff]
  %v1675 = vld [vmem:[%s2 + $0xe8] sm:$0xff]
  %v1676 = vld [vmem:[%s2 + $0xf0] sm:$0xff]
  %v1677 = vld [vmem:[%s2 + $0xf8] sm:$0xff]
  %v1678 = vmul.f32 %v1646, 0.33333334
  %v1679 = vmul.f32 %v1647, 0.33333334
  %v1680 = vmul.f32 %v1648, 0.33333334
  %v1681 = vmul.f32 %v1649, 0.33333334
  %v1682 = vmul.f32 %v1650, 0.33333334
  %v1683 = vmul.f32 %v1651, 0.33333334
  %v1684 = vmul.f32 %v1652, 0.33333334
  %v1685 = vmul.f32 %v1653, 0.33333334
  %v1686 = vmul.f32 %v1654, 0.33333334
  %v1687 = vmul.f32 %v1655, 0.33333334
  %v1688 = vmul.f32 %v1656, 0.33333334
  %v1689 = vmul.f32 %v1657, 0.33333334
  %v1690 = vmul.f32 %v1658, 0.33333334
  %v1691 = vmul.f32 %v1659, 0.33333334
  %v1692 = vmul.f32 %v1660, 0.33333334
  %v1693 = vmul.f32 %v1661, 0.33333334
  %v1694 = vmul.f32 %v1662, 0.33333334
  %v1695 = vmul.f32 %v1663, 0.33333334
  %v1696 = vmul.f32 %v1664, 0.33333334
  %v1697 = vmul.f32 %v1665, 0.33333334
  %v1698 = vmul.f32 %v1666, 0.33333334
  %v1699 = vmul.f32 %v1667, 0.33333334
  %v1700 = vmul.f32 %v1668, 0.33333334
  %v1701 = vmul.f32 %v1669, 0.33333334
  %v1702 = vmul.f32 %v1670, 0.33333334
  %v1703 = vmul.f32 %v1671, 0.33333334
  %v1704 = vmul.f32 %v1672, 0.33333334
  %v1705 = vmul.f32 %v1673, 0.33333334
  %v1706 = vmul.f32 %v1674, 0.33333334
  %v1707 = vmul.f32 %v1675, 0.33333334
  %v1708 = vmul.f32 %v1676, 0.33333334
  %v1709 = vmul.f32 %v1677, 0.33333334
  %1710 = vst [vmem:[%s2] sm:$0xff] %v1678
  %1711 = vst [vmem:[%s2 + $0x8] sm:$0xff] %v1679
  %1712 = vst [vmem:[%s2 + $0x10] sm:$0xff] %v1680
  %1713 = vst [vmem:[%s2 + $0x18] sm:$0xff] %v1681
  %1714 = vst [vmem:[%s2 + $0x20] sm:$0xff] %v1682
  %1715 = vst [vmem:[%s2 + $0x28] sm:$0xff] %v1683
  %1716 = vst [vmem:[%s2 + $0x30] sm:$0xff] %v1684
  %1717 = vst [vmem:[%s2 + $0x38] sm:$0xff] %v1685
  %1718 = vst [vmem:[%s2 + $0x40] sm:$0xff] %v1686
  %1719 = vst [vmem:[%s2 + $0x48] sm:$0xff] %v1687
  %1720 = vst [vmem:[%s2 + $0x50] sm:$0xff] %v1688
  %1721 = vst [vmem:[%s2 + $0x58] sm:$0xff] %v1689
  %1722 = vst [vmem:[%s2 + $0x60] sm:$0xff] %v1690
  %1723 = vst [vmem:[%s2 + $0x68] sm:$0xff] %v1691
  %1724 = vst [vmem:[%s2 + $0x70] sm:$0xff] %v1692
  %1725 = vst [vmem:[%s2 + $0x78] sm:$0xff] %v1693
  %1726 = vst [vmem:[%s2 + $0x80] sm:$0xff] %v1694
  %1727 = vst [vmem:[%s2 + $0x88] sm:$0xff] %v1695
  %1728 = vst [vmem:[%s2 + $0x90] sm:$0xff] %v1696
  %1729 = vst [vmem:[%s2 + $0x98] sm:$0xff] %v1697
  %1730 = vst [vmem:[%s2 + $0xa0] sm:$0xff] %v1698
  %1731 = vst [vmem:[%s2 + $0xa8] sm:$0xff] %v1699
  %1732 = vst [vmem:[%s2 + $0xb0] sm:$0xff] %v1700
  %1733 = vst [vmem:[%s2 + $0xb8] sm:$0xff] %v1701
  %1734 = vst [vmem:[%s2 + $0xc0] sm:$0xff] %v1702
  %1735 = vst [vmem:[%s2 + $0xc8] sm:$0xff] %v1703
  %1736 = vst [vmem:[%s2 + $0xd0] sm:$0xff] %v1704
  %1737 = vst [vmem:[%s2 + $0xd8] sm:$0xff] %v1705
  %1738 = vst [vmem:[%s2 + $0xe0] sm:$0xff] %v1706
  %1739 = vst [vmem:[%s2 + $0xe8] sm:$0xff] %v1707
  %1740 = vst [vmem:[%s2 + $0xf0] sm:$0xff] %v1708
  %1741 = vst [vmem:[%s2 + $0xf8] sm:$0xff] %v1709
  // Predicated region
  $region10: #{heterogeneous_gnn_forward.1} parent=0 // pred_check
    _
  $region11: #{heterogeneous_gnn_forward.1} parent=0 // pred_check_branch
    %1743 = sbr.rel (0) target = $region13
  $region12: #{heterogeneous_gnn_forward.1} parent=0 // pred_region
    _
  $region13: #{heterogeneous_gnn_forward.1} parent=0 // pred_fallthru
    _
  // Predicated region
  $region14: #{heterogeneous_gnn_forward.1} parent=0 // pred_check
    _
  $region15: #{heterogeneous_gnn_forward.1} parent=0 // pred_check_branch
    %1745 = sbr.rel (0) target = $region17
  $region16: #{heterogeneous_gnn_forward.1} parent=0 // pred_region
    _
  $region17: #{heterogeneous_gnn_forward.1} parent=0 // pred_fallthru
    _

</llo_original>
